<compile_context>
chip_gen: v7x
topology: tpu7x:2x2x1
jax: 0.10.0
libtpu: 0.0.40
codegen_flags: <defaults>
</compile_context>

<pallas_src>
import functools

import jax
import jax.numpy as jnp
from jax import lax
from jax.experimental import pallas as pl
from jax.experimental.pallas import tpu as pltpu

_NEG_INF = -1e30


# ----------------------------------------------------------------------------
# Generation-aware VMEM budget and tile derivation (review items 3 & 4)
# ----------------------------------------------------------------------------
def _vmem_limit_bytes():
    """Scoped-VMEM budget from the local chip's physical VMEM.

    v5e/v6e (128 MiB) -> ~96 MiB, v7x (64 MiB) -> ~48 MiB.  Falls back to a
    conservative 48 MiB if the query is unavailable.
    """
    try:
        phys = pltpu.get_tpu_info().vmem_capacity_bytes
    except Exception:
        phys = 64 * 1024 * 1024
    return int(min(max(phys * 3 // 4, 32 * 1024 * 1024), 112 * 1024 * 1024))


def _round_up(x, m):
    return (x + m - 1) // m * m


def _pick_tile(total, cap, mult=1):
    """Largest divisor of `total` that is <= cap and a multiple of `mult`
    (or the full extent); prefers >= 2 grid steps unless that would shrink
    the tile by more than 4x.

    NOTE (review concern): if `total` has no suitable divisor this silently
    falls back to a single full block; at production sizes pad T / N upfront
    so a clean tile exists (or switch to a cdiv grid with masked tails).
    """
    cap = max(1, int(cap))
    tt1, tt2 = 0, 0
    for q in range(1, total + 1):
        if total % q:
            continue
        if q > cap:
            continue
        if q % mult != 0 and q != total:
            continue
        tt1 = q
        if total // q >= 2:
            tt2 = q
    if tt1 == 0:
        tt1 = total
    if tt2 and tt2 * 4 >= tt1:
        return tt2
    return tt1


def _gru_time_tile(t, b, d, x_bytes, vmem_limit):
    budget = int(vmem_limit * 0.6)
    # per time-step block bytes: x (double-buffered) + out (double-buffered)
    # + mask (double-buffered) + f32 gx scratch (single-buffered)
    per_t = 2 * b * d * x_bytes + 2 * b * d * x_bytes + 2 * b * 4 + b * 3 * d * 4
    fixed = 4 * d * 3 * d * x_bytes + b * d * 4 + 16 * d * 4
    cap = (budget - fixed) // max(per_t, 1)
    cap = max(1, min(cap, 256))
    return _pick_tile(t, cap, mult=1)


def _row_tile(n, d, x_bytes, vmem_limit):
    budget = int(vmem_limit * 0.6)
    fixed = 2 * d * d * x_bytes + 16 * d * 4
    per_row = 2 * (d * x_bytes + 16)
    cap = (budget - fixed) // max(per_row, 1)
    cap = max(8, min(cap, 2048))
    mult = 8 * (4 // x_bytes)            # sublane packing: f32 -> 8, bf16 -> 16
    return _pick_tile(n, cap, mult=mult)


def _gru_unroll(b, d, tt):
    """Vreg-aware unroll (review item 11): each unrolled step keeps ~B*3D-sized
    gate sets live; the vreg file is 64 x 4 KiB on all generations."""
    gate_vregs = (b * 3 * d) // 1024 + 1
    if gate_vregs > 16:
        u = 2
    elif gate_vregs > 8:
        u = 4
    else:
        u = 8
    return max(1, min(u, tt))


# ----------------------------------------------------------------------------
# GRU recurrence kernel with fused input projection (DynamicRNN).
# Grid = (batch_shard [parallel], time [arbitrary]); hidden state lives in a
# per-shard VMEM scratch that persists across the serial time axis.
# ----------------------------------------------------------------------------
def _gru_fused_kernel(x_ref, m_ref, wx_ref, bx_ref, wh_ref, bhn_ref,
                      out_ref, gx_ref, h_ref, *, unroll):
    # x_ref  : (TT, Bh, D)   time-major input block (compute dtype)
    # m_ref  : (TT, Bh, 1)   float32 mask block
    # wx_ref : (D, 3D)       fused input-gate weights  W_i{r|z|n}^T (compute dtype)
    # bx_ref : (1, 3D)       input bias with b_hr/b_hz folded in (f32)
    # wh_ref : (D, 3D)       fused hidden-gate weights W_h{r|z|n}^T (compute dtype)
    # bhn_ref: (1, D)        hidden bias of the n gate only (f32)
    # out_ref: (TT, Bh, D)   masked GRU outputs (compute dtype)
    # gx_ref : (TT, Bh, 3D)  f32 VMEM scratch: this block's input projections
    # h_ref  : (Bh, D)       f32 VMEM scratch hidden state (persists over time)
    tt, b, d = x_ref.shape

    @pl.when(pl.program_id(1) == 0)
    def _():
        h_ref[...] = jnp.zeros(h_ref.shape, h_ref.dtype)

    # Fused input projection for the whole time block: ONE large-M MXU matmul
    # per TT serial steps -> the (T,B,3D) gate slab never goes through HBM.
    # (B is padded to a sublane multiple so these reshapes are layout-free.)
    xb = x_ref[...].reshape(tt * b, d)
    gx = jnp.dot(xb, wx_ref[...], preferred_element_type=jnp.float32) + bx_ref[...]
    gx_ref[...] = gx.reshape(tt, b, 3 * d)

    bhn = jnp.broadcast_to(bhn_ref[...], (b, d))   # hoisted: broadcasts aren't CSE'd
    cdt = wh_ref.dtype

    def step(t, carry):
        gxt = gx_ref[t]                                            # (Bh, 3D) f32
        h = h_ref[...]                                             # (Bh, D)  f32
        # Only the hidden matmul remains on the serial critical path.
        # TODO(synk): keep wh stationary in the MXU via pltpu.matmul_push_rhs /
        # matmul_acc_lhs (review item 7) to avoid re-streaming weights per step.
        gh = jnp.dot(h.astype(cdt), wh_ref[...],
                     preferred_element_type=jnp.float32)           # (Bh, 3D)
        # NOTE (item 9): for D % 128 != 0 these lane-axis gate slices force a
        # relayout on every serial step; pad D to a multiple of 128 at
        # production sizes.
        r = jax.nn.sigmoid(gxt[:, 0:d] + gh[:, 0:d])
        z = jax.nn.sigmoid(gxt[:, d:2 * d] + gh[:, d:2 * d])
        n = jnp.tanh(gxt[:, 2 * d:] + r * (gh[:, 2 * d:] + bhn))
        h_new = (1.0 - z) * n + z * h                              # unmasked carry
        h_ref[...] = h_new
        out_ref[t] = (h_new * m_ref[t]).astype(out_ref.dtype)
        return carry

    lax.fori_loop(0, tt, step, 0, unroll=unroll)


def gru_fused(xt, mask_tb1, wx, bx_folded, wh, bh_n, *, vmem_limit):
    """xt: (T, B_pad, D) time-major, compute dtype; mask_tb1: (T, B_pad, 1) f32.
    Returns masked GRU outputs (T, B_pad, D) in the compute dtype."""
    t, b, d = xt.shape
    x_bytes = jnp.dtype(xt.dtype).itemsize
    # v7x: split the batch across the two TensorCores (review item 5).
    n_bshard = 2 if (b % 32 == 0) else 1
    bh_rows = b // n_bshard
    tt = _gru_time_tile(t, bh_rows, d, x_bytes, vmem_limit)
    unroll = _gru_unroll(bh_rows, d, tt)
    kernel = functools.partial(_gru_fused_kernel, unroll=unroll)
    return pl.pallas_call(
        kernel,
        out_shape=jax.ShapeDtypeStruct((t, b, d), xt.dtype),
        grid=(n_bshard, t // tt),
        in_specs=[
            pl.BlockSpec((tt, bh_rows, d), lambda s, i: (i, s, 0)),
            pl.BlockSpec((tt, bh_rows, 1), lambda s, i: (i, s, 0)),
            pl.BlockSpec((d, 3 * d), lambda s, i: (0, 0)),
            pl.BlockSpec((1, 3 * d), lambda s, i: (0, 0)),
            pl.BlockSpec((d, 3 * d), lambda s, i: (0, 0)),
            pl.BlockSpec((1, d), lambda s, i: (0, 0)),
        ],
        out_specs=pl.BlockSpec((tt, bh_rows, d), lambda s, i: (i, s, 0)),
        scratch_shapes=[
            pltpu.VMEM((tt, bh_rows, 3 * d), jnp.float32),   # block gate scratch
            pltpu.VMEM((bh_rows, d), jnp.float32),           # hidden-state carry
        ],
        compiler_params=pltpu.CompilerParams(
            dimension_semantics=("parallel", "arbitrary"),
            vmem_limit_bytes=vmem_limit,
        ),
    )(xt, mask_tb1, wx, bx_folded, wh, bh_n)


# ----------------------------------------------------------------------------
# Prediction-head kernel: Conv1D(k=1) -> LayerNorm -> ReLU -> Conv1D(k=1) -> mask
# Row-tiled, fully parallel.  D->1 projection is a VPU multiply + lane reduce.
# ----------------------------------------------------------------------------
def _pred_head_kernel(x_ref, m_ref, w1_ref, b1_ref, g_ref, beta_ref,
                      w2_ref, b2_ref, out_ref):
    h = jnp.dot(x_ref[...], w1_ref[...],
                preferred_element_type=jnp.float32) + b1_ref[...]
    mu = jnp.mean(h, axis=-1, keepdims=True)
    var = jnp.mean(jnp.square(h - mu), axis=-1, keepdims=True)
    hn = (h - mu) * lax.rsqrt(var + 1e-6) * g_ref[...] + beta_ref[...]
    hn = jnp.maximum(hn, 0.0)
    logit = jnp.sum(hn * w2_ref[...], axis=-1, keepdims=True) + b2_ref[...]
    # TODO(synk): lane-dense logit output (review item 12) — modest win here
    # since the store volume is only N*4 bytes; kept as a (tm, 1) column.
    out_ref[...] = logit + (1.0 - m_ref[...]) * _NEG_INF


def pred_head(feat2d, mask_rows, head_params, *, vmem_limit):
    """feat2d: (N, D) compute dtype; mask_rows: (N, 1) f32 -> masked logits (N, 1)."""
    w1, b1, gamma, beta, w2, b2 = head_params
    n, d = feat2d.shape
    x_bytes = jnp.dtype(feat2d.dtype).itemsize
    tm = _row_tile(n, d, x_bytes, vmem_limit)
    return pl.pallas_call(
        _pred_head_kernel,
        out_shape=jax.ShapeDtypeStruct((n, 1), jnp.float32),
        grid=(n // tm,),
        in_specs=[
            pl.BlockSpec((tm, d), lambda i: (i, 0)),
            pl.BlockSpec((tm, 1), lambda i: (i, 0)),
            pl.BlockSpec((d, d), lambda i: (0, 0)),
            pl.BlockSpec((1, d), lambda i: (0, 0)),
            pl.BlockSpec((1, d), lambda i: (0, 0)),
            pl.BlockSpec((1, d), lambda i: (0, 0)),
            pl.BlockSpec((1, d), lambda i: (0, 0)),
            pl.BlockSpec((1, 1), lambda i: (0, 0)),
        ],
        out_specs=pl.BlockSpec((tm, 1), lambda i: (i, 0)),
        compiler_params=pltpu.CompilerParams(
            dimension_semantics=("parallel",),
            vmem_limit_bytes=vmem_limit,
        ),
    )(feat2d, mask_rows, w1, b1, gamma, beta, w2, b2)


# ----------------------------------------------------------------------------
# Parameter preparation: dtype casting + r/z hidden-bias folding (item 10).
# ----------------------------------------------------------------------------
def _prepare_params(params, compute_dtype):
    def prep_gru(gp):
        wx, wh, bx, bh = gp
        d = wx.shape[0]
        # Fold b_hr, b_hz into the input bias (valid for r/z only); b_hn must
        # stay inside tanh(gx_n + r * (h @ Wh_n + b_hn)).
        bx_f = bx.at[:, : 2 * d].add(bh[:, : 2 * d]).astype(jnp.float32)
        bh_n = bh[:, 2 * d:].astype(jnp.float32)
        return (wx.astype(compute_dtype), bx_f, wh.astype(compute_dtype), bh_n)

    def prep_block(bp):
        w1, b1, gamma, beta, w2, b2 = bp
        return (w1.astype(compute_dtype), b1.astype(jnp.float32),
                gamma.astype(jnp.float32), beta.astype(jnp.float32),
                w2.astype(jnp.float32), b2.astype(jnp.float32))

    return {
        "gru_start": prep_gru(params["gru_start"]),
        "gru_end": prep_gru(params["gru_end"]),
        "start_block": prep_block(params["start_block"]),
        "end_block": prep_block(params["end_block"]),
    }


# ----------------------------------------------------------------------------
# Full CommonPredictor forward.
# ----------------------------------------------------------------------------
def common_predictor_forward(x, mask, params, compute_dtype=jnp.bfloat16):
    B, T, D = x.shape
    vmem_limit = _vmem_limit_bytes()
    p = _prepare_params(params, compute_dtype)

    # Pad the batch to a sublane multiple (item 8): full MXU rows in the
    # per-step matmul and layout-free (TT,B,D)<->(TT*B,D) reshapes in-kernel.
    pad_mult = 16 if jnp.dtype(compute_dtype).itemsize == 2 else 8
    Bp = _round_up(B, pad_mult)
    if Bp != B:
        x = jnp.pad(x, ((0, Bp - B), (0, 0), (0, 0)))
        mask = jnp.pad(mask, ((0, Bp - B), (0, 0)))

    mask_f = mask.astype(jnp.float32)
    # Single remaining layout op (item 1/6): with the projection fused into the
    # GRU there is no gate_proj kernel to fold this reorder into; doing it once
    # in the compute dtype halves the write traffic vs. the previous version.
    xt = jnp.transpose(x, (1, 0, 2)).astype(compute_dtype)        # (T, Bp, D)
    mt = jnp.transpose(mask_f, (1, 0))                            # (T, Bp) tiny
    mt3 = mt[:, :, None]                                          # (T, Bp, 1)
    m_rows = mt.reshape(T * Bp, 1)                                # (N, 1)

    # start / end encoders (end encoder consumes the masked start features)
    sf = gru_fused(xt, mt3, *p["gru_start"], vmem_limit=vmem_limit)   # (T,Bp,D)
    ef = gru_fused(sf, mt3, *p["gru_end"], vmem_limit=vmem_limit)     # (T,Bp,D)

    # prediction heads (start head and end GRU are data-independent)
    ls = pred_head(sf.reshape(T * Bp, D), m_rows, p["start_block"],
                   vmem_limit=vmem_limit)                             # (N, 1)
    le = pred_head(ef.reshape(T * Bp, D), m_rows, p["end_block"],
                   vmem_limit=vmem_limit)                             # (N, 1)

    start_logits = jnp.transpose(ls.reshape(T, Bp), (1, 0))[:B]   # (B, T) tiny
    end_logits = jnp.transpose(le.reshape(T, Bp), (1, 0))[:B]
    return {"grounding_start_loc": start_logits, "grounding_end_loc": end_logits}


# ----------------------------------------------------------------------------
# Deterministic parameter construction (synthetic; no checkpoint loading)
# ----------------------------------------------------------------------------
def make_gru_params(key, dim):
    k = jax.random.split(key, 4)
    wx = 0.2 * jax.random.normal(k[0], (dim, 3 * dim), jnp.float32)  # W_i{r|z|n}^T
    wh = 0.2 * jax.random.normal(k[1], (dim, 3 * dim), jnp.float32)  # W_h{r|z|n}^T
    bx = 0.1 * jax.random.normal(k[2], (1, 3 * dim), jnp.float32)
    bh = 0.1 * jax.random.normal(k[3], (1, 3 * dim), jnp.float32)
    return (wx, wh, bx, bh)


def make_block_params(key, dim):
    k = jax.random.split(key, 4)
    w1 = 0.2 * jax.random.normal(k[0], (dim, dim), jnp.float32)      # Conv1D(D->D,k=1)
    b1 = 0.1 * jax.random.normal(k[1], (1, dim), jnp.float32)
    gamma = jnp.ones((1, dim), jnp.float32)                          # LayerNorm weight
    beta = jnp.zeros((1, dim), jnp.float32)                          # LayerNorm bias
    w2 = 0.2 * jax.random.normal(k[2], (1, dim), jnp.float32)        # Conv1D(D->1,k=1)
    b2 = 0.1 * jax.random.normal(k[3], (1, 1), jnp.float32)
    return (w1, b1, gamma, beta, w2, b2)


# ----------------------------------------------------------------------------
# Pure-JAX reference (correctness oracle, PyTorch-faithful, all f32)
# ----------------------------------------------------------------------------
def _dot(a, b):
    return jnp.dot(a, b, precision=lax.Precision.HIGHEST)


def gru_ref(x, mask_f, params):
    wx, wh, bx, bh = params
    B, T, D = x.shape

    def step(h, inp):
        x_t, m_t = inp
        gx = _dot(x_t, wx) + bx
        gh = _dot(h, wh) + bh
        r = jax.nn.sigmoid(gx[:, :D] + gh[:, :D])
        z = jax.nn.sigmoid(gx[:, D:2 * D] + gh[:, D:2 * D])
        n = jnp.tanh(gx[:, 2 * D:] + r * gh[:, 2 * D:])
        h_new = (1.0 - z) * n + z * h
        return h_new, h_new * m_t[:, None]

    h0 = jnp.zeros((B, D), jnp.float32)
    _, outs = lax.scan(step, h0, (jnp.swapaxes(x, 0, 1), jnp.swapaxes(mask_f, 0, 1)))
    return jnp.swapaxes(outs, 0, 1)


def pred_ref(feat, mask_f, params):
    w1, b1, g, beta, w2, b2 = params
    h = _dot(feat, w1) + b1
    mu = jnp.mean(h, axis=-1, keepdims=True)
    var = jnp.mean(jnp.square(h - mu), axis=-1, keepdims=True)
    hn = (h - mu) * lax.rsqrt(var + 1e-6) * g + beta
    hn = jnp.maximum(hn, 0.0)
    logit = jnp.sum(hn * w2, axis=-1) + b2[0, 0]
    return logit + (1.0 - mask_f) * _NEG_INF


def common_predictor_ref(x, mask, params):
    mask_f = mask.astype(jnp.float32)
    sf = gru_ref(x, mask_f, params["gru_start"])
    ef = gru_ref(sf, mask_f, params["gru_end"])
    return {
        "grounding_start_loc": pred_ref(sf, mask_f, params["start_block"]),
        "grounding_end_loc": pred_ref(ef, mask_f, params["end_block"]),
    }


# ----------------------------------------------------------------------------
# Self-check
# ----------------------------------------------------------------------------
if __name__ == "__main__":
    def build_params(key, dim):
        kp1, kp2, kp3, kp4 = jax.random.split(key, 4)
        return {
            "gru_start": make_gru_params(kp1, dim),
            "gru_end": make_gru_params(kp2, dim),
            "start_block": make_block_params(kp3, dim),
            "end_block": make_block_params(kp4, dim),
        }

    def check(B, T, D, lengths, compute_dtype, rtol, atol):
        key = jax.random.PRNGKey(0)
        kx, kp = jax.random.split(key)
        x = jax.random.normal(kx, (B, T, D), jnp.float32)
        lengths = jnp.asarray(lengths, jnp.int32)
        mask = (jnp.arange(T)[None, :] < lengths[:, None]).astype(jnp.float32)
        params = build_params(kp, D)
        fwd = jax.jit(functools.partial(common_predictor_forward, params=params,
                                        compute_dtype=compute_dtype))
        out = fwd(x, mask)
        jax.block_until_ready(out)
        ref = common_predictor_ref(x, mask, params)
        for name in ("grounding_start_loc", "grounding_end_loc"):
            assert out[name].shape == (B, T), (name, out[name].shape)
            assert jnp.allclose(out[name], ref[name], rtol=rtol, atol=atol), name

    # 1) f32 path: bit-faithful recurrence, tight tolerance.
    check(2, 8, 32, [8, 5], jnp.float32, 1e-3, 1e-2)
    # 2) bf16 MXU-operand path (the perf default): relaxed tolerance because
    #    operand rounding accumulates through two recurrences + heads.
    check(2, 8, 32, [8, 5], jnp.bfloat16, 5e-2, 1e-1)
    # 3) batch padding + 2-way batch-shard branch (B_pad % 32 == 0), f32.
    check(30, 12, 48, [(i % 12) + 1 for i in range(30)], jnp.float32, 1e-3, 1e-2)

    print("KERNEL_OK")
</pallas_src>

<mosaic_0001>
module attributes {stable_mosaic.version = 11 : i64} {
  func.func @_gru_fused_kernel(%arg0: i32, %arg1: i32, %arg2: memref<4x8x32xf32, #tpu.memory_space<vmem>>, %arg3: memref<4x8x1xf32, #tpu.memory_space<vmem>>, %arg4: memref<32x96xf32, #tpu.memory_space<vmem>>, %arg5: memref<1x96xf32, #tpu.memory_space<vmem>>, %arg6: memref<32x96xf32, #tpu.memory_space<vmem>>, %arg7: memref<1x32xf32, #tpu.memory_space<vmem>>, %arg8: memref<4x8x32xf32, #tpu.memory_space<vmem>>, %arg9: memref<4x8x96xf32, #tpu.memory_space<vmem>>, %arg10: memref<8x32xf32, #tpu.memory_space<vmem>>) attributes {dimension_semantics = [#tpu.dimension_semantics<parallel>, #tpu.dimension_semantics<arbitrary>], iteration_bounds = array<i64: 1, 2>, scalar_prefetch = 0 : i64, scratch_operands = 2 : i64, tpu.core_type = #tpu.core_type<tc>, window_params = [{transform_indices = @transform_0, window_bounds = array<i64: 4, 8, 32>}, {transform_indices = @transform_1, window_bounds = array<i64: 4, 8, 1>}, {pipeline_mode = #tpu.pipeline_mode<synchronous>, transform_indices = @transform_2, window_bounds = array<i64: 32, 96>}, {pipeline_mode = #tpu.pipeline_mode<synchronous>, transform_indices = @transform_3, window_bounds = array<i64: 1, 96>}, {pipeline_mode = #tpu.pipeline_mode<synchronous>, transform_indices = @transform_4, window_bounds = array<i64: 32, 96>}, {pipeline_mode = #tpu.pipeline_mode<synchronous>, transform_indices = @transform_5, window_bounds = array<i64: 1, 32>}, {transform_indices = @transform_6, window_bounds = array<i64: 4, 8, 32>}]} {
    %c0_i32 = arith.constant 0 : i32
    %0 = arith.cmpi eq, %arg1, %c0_i32 : i32
    %1 = arith.extui %0 : i1 to i32
    %c0_i32_0 = arith.constant 0 : i32
    %2 = arith.cmpi ne, %1, %c0_i32_0 : i32
    scf.if %2 {
      %cst_77 = arith.constant 0.000000e+00 : f32
      %187 = vector.broadcast %cst_77 : f32 to vector<8x32xf32>
      %c0_78 = arith.constant 0 : index
      %c0_79 = arith.constant 0 : index
      %188 = vector.load %arg10[%c0_78, %c0_79] : memref<8x32xf32, #tpu.memory_space<vmem>>, vector<8x32xf32>
      tpu.vector_store %arg10[%c0_78, %c0_79], %187 {strides = array<i32>} : memref<8x32xf32, #tpu.memory_space<vmem>>, vector<8x32xf32>,
    } else {
    }
    %c0 = arith.constant 0 : index
    %c0_1 = arith.constant 0 : index
    %c0_2 = arith.constant 0 : index
    %3 = vector.load %arg2[%c0, %c0_1, %c0_2] : memref<4x8x32xf32, #tpu.memory_space<vmem>>, vector<4x8x32xf32>
    %4 = vector.shape_cast %3 : vector<4x8x32xf32> to vector<32x32xf32>
    %c0_3 = arith.constant 0 : index
    %c0_4 = arith.constant 0 : index
    %5 = vector.load %arg4[%c0_3, %c0_4] : memref<32x96xf32, #tpu.memory_space<vmem>>, vector<32x96xf32>
    %cst = arith.constant dense<0.000000e+00> : vector<32x96xf32>
    %6 = tpu.matmul %4, %5, %cst {dimension_numbers = #tpu.dot_dimension_numbers<[1], [0], [0], [1], [0, 0, 1, 1], [], []>} : vector<32x32xf32>, vector<32x96xf32>, vector<32x96xf32> -> vector<32x96xf32>
    %c0_5 = arith.constant 0 : index
    %c0_6 = arith.constant 0 : index
    %7 = vector.load %arg5[%c0_5, %c0_6] : memref<1x96xf32, #tpu.memory_space<vmem>>, vector<1x96xf32>
    %8 = vector.broadcast %7 : vector<1x96xf32> to vector<32x96xf32>
    %9 = arith.addf %6, %8 : vector<32x96xf32>
    %10 = vector.shape_cast %9 : vector<32x96xf32> to vector<4x8x96xf32>
    %c0_7 = arith.constant 0 : index
    %c0_8 = arith.constant 0 : index
    %c0_9 = arith.constant 0 : index
    %11 = vector.load %arg9[%c0_7, %c0_8, %c0_9] : memref<4x8x96xf32, #tpu.memory_space<vmem>>, vector<4x8x96xf32>
    tpu.vector_store %arg9[%c0_7, %c0_8, %c0_9], %10 {strides = array<i32>} : memref<4x8x96xf32, #tpu.memory_space<vmem>>, vector<4x8x96xf32>,
    %c0_10 = arith.constant 0 : index
    %c0_11 = arith.constant 0 : index
    %12 = vector.load %arg7[%c0_10, %c0_11] : memref<1x32xf32, #tpu.memory_space<vmem>>, vector<1x32xf32>
    %13 = vector.shape_cast %12 : vector<1x32xf32> to vector<1x32xf32>
    %14 = vector.broadcast %13 : vector<1x32xf32> to vector<8x32xf32>
    %c0_i32_12 = arith.constant 0 : i32
    %15 = arith.index_cast %c0_i32_12 : i32 to index
    %c0_13 = arith.constant 0 : index
    %c0_14 = arith.constant 0 : index
    %16 = vector.load %arg9[%15, %c0_13, %c0_14] : memref<4x8x96xf32, #tpu.memory_space<vmem>>, vector<1x8x96xf32>
    %17 = vector.shape_cast %16 : vector<1x8x96xf32> to vector<8x96xf32>
    %c0_15 = arith.constant 0 : index
    %c0_16 = arith.constant 0 : index
    %18 = vector.load %arg10[%c0_15, %c0_16] : memref<8x32xf32, #tpu.memory_space<vmem>>, vector<8x32xf32>
    %c0_17 = arith.constant 0 : index
    %c0_18 = arith.constant 0 : index
    %19 = vector.load %arg6[%c0_17, %c0_18] : memref<32x96xf32, #tpu.memory_space<vmem>>, vector<32x96xf32>
    %cst_19 = arith.constant dense<0.000000e+00> : vector<8x96xf32>
    %20 = tpu.matmul %18, %19, %cst_19 {dimension_numbers = #tpu.dot_dimension_numbers<[1], [0], [0], [1], [0, 0, 1, 1], [], []>} : vector<8x32xf32>, vector<32x96xf32>, vector<8x96xf32> -> vector<8x96xf32>
    %21 = vector.extract_strided_slice %17 {offsets = [0, 0], sizes = [8, 32], strides = [1, 1]} : vector<8x96xf32> to vector<8x32xf32>
    %22 = vector.extract_strided_slice %20 {offsets = [0, 0], sizes = [8, 32], strides = [1, 1]} : vector<8x96xf32> to vector<8x32xf32>
    %23 = arith.addf %21, %22 : vector<8x32xf32>
    %24 = arith.negf %23 : vector<8x32xf32>
    %25 = math.exp %24 : vector<8x32xf32>
    %cst_20 = arith.constant 1.000000e+00 : f32
    %26 = vector.broadcast %cst_20 : f32 to vector<8x32xf32>
    %27 = arith.addf %26, %25 : vector<8x32xf32>
    %28 = arith.divf %26, %27 : vector<8x32xf32>
    %29 = vector.extract_strided_slice %17 {offsets = [0, 32], sizes = [8, 32], strides = [1, 1]} : vector<8x96xf32> to vector<8x32xf32>
    %30 = vector.extract_strided_slice %20 {offsets = [0, 32], sizes = [8, 32], strides = [1, 1]} : vector<8x96xf32> to vector<8x32xf32>
    %31 = arith.addf %29, %30 : vector<8x32xf32>
    %32 = arith.negf %31 : vector<8x32xf32>
    %33 = math.exp %32 : vector<8x32xf32>
    %cst_21 = arith.constant 1.000000e+00 : f32
    %34 = vector.broadcast %cst_21 : f32 to vector<8x32xf32>
    %35 = arith.addf %34, %33 : vector<8x32xf32>
    %36 = arith.divf %34, %35 : vector<8x32xf32>
    %37 = vector.extract_strided_slice %17 {offsets = [0, 64], sizes = [8, 32], strides = [1, 1]} : vector<8x96xf32> to vector<8x32xf32>
    %38 = vector.extract_strided_slice %20 {offsets = [0, 64], sizes = [8, 32], strides = [1, 1]} : vector<8x96xf32> to vector<8x32xf32>
    %39 = arith.addf %38, %14 : vector<8x32xf32>
    %40 = arith.mulf %28, %39 : vector<8x32xf32>
    %41 = arith.addf %37, %40 : vector<8x32xf32>
    %42 = math.tanh %41 : vector<8x32xf32>
    %cst_22 = arith.constant 1.000000e+00 : f32
    %43 = vector.broadcast %cst_22 : f32 to vector<8x32xf32>
    %44 = arith.subf %43, %36 : vector<8x32xf32>
    %45 = arith.mulf %44, %42 : vector<8x32xf32>
    %46 = arith.mulf %36, %18 : vector<8x32xf32>
    %47 = arith.addf %45, %46 : vector<8x32xf32>
    %c0_23 = arith.constant 0 : index
    %c0_24 = arith.constant 0 : index
    %48 = vector.load %arg10[%c0_23, %c0_24] : memref<8x32xf32, #tpu.memory_space<vmem>>, vector<8x32xf32>
    tpu.vector_store %arg10[%c0_23, %c0_24], %47 {strides = array<i32>} : memref<8x32xf32, #tpu.memory_space<vmem>>, vector<8x32xf32>,
    %49 = arith.index_cast %c0_i32_12 : i32 to index
    %c0_25 = arith.constant 0 : index
    %c0_26 = arith.constant 0 : index
    %50 = vector.load %arg3[%49, %c0_25, %c0_26] : memref<4x8x1xf32, #tpu.memory_space<vmem>>, vector<1x8x1xf32>
    %51 = vector.shape_cast %50 : vector<1x8x1xf32> to vector<8x1xf32>
    %52 = vector.broadcast %51 : vector<8x1xf32> to vector<8x32xf32>
    %53 = arith.mulf %47, %52 : vector<8x32xf32>
    %54 = arith.index_cast %c0_i32_12 : i32 to index
    %c0_27 = arith.constant 0 : index
    %c0_28 = arith.constant 0 : index
    %55 = vector.load %arg8[%54, %c0_27, %c0_28] : memref<4x8x32xf32, #tpu.memory_space<vmem>>, vector<1x8x32xf32>
    %56 = vector.shape_cast %55 : vector<1x8x32xf32> to vector<8x32xf32>
    %57 = vector.shape_cast %53 : vector<8x32xf32> to vector<1x8x32xf32>
    tpu.vector_store %arg8[%54, %c0_27, %c0_28], %57 {strides = array<i32>} : memref<4x8x32xf32, #tpu.memory_space<vmem>>, vector<1x8x32xf32>,
    %c1_i32 = arith.constant 1 : i32
    %58 = arith.index_cast %c1_i32 : i32 to index
    %c0_29 = arith.constant 0 : index
    %c0_30 = arith.constant 0 : index
    %59 = vector.load %arg9[%58, %c0_29, %c0_30] : memref<4x8x96xf32, #tpu.memory_space<vmem>>, vector<1x8x96xf32>
    %60 = vector.shape_cast %59 : vector<1x8x96xf32> to vector<8x96xf32>
    %c0_31 = arith.constant 0 : index
    %c0_32 = arith.constant 0 : index
    %61 = vector.load %arg10[%c0_31, %c0_32] : memref<8x32xf32, #tpu.memory_space<vmem>>, vector<8x32xf32>
    %c0_33 = arith.constant 0 : index
    %c0_34 = arith.constant 0 : index
    %62 = vector.load %arg6[%c0_33, %c0_34] : memref<32x96xf32, #tpu.memory_space<vmem>>, vector<32x96xf32>
    %cst_35 = arith.constant dense<0.000000e+00> : vector<8x96xf32>
    %63 = tpu.matmul %61, %62, %cst_35 {dimension_numbers = #tpu.dot_dimension_numbers<[1], [0], [0], [1], [0, 0, 1, 1], [], []>} : vector<8x32xf32>, vector<32x96xf32>, vector<8x96xf32> -> vector<8x96xf32>
    %64 = vector.extract_strided_slice %60 {offsets = [0, 0], sizes = [8, 32], strides = [1, 1]} : vector<8x96xf32> to vector<8x32xf32>
    %65 = vector.extract_strided_slice %63 {offsets = [0, 0], sizes = [8, 32], strides = [1, 1]} : vector<8x96xf32> to vector<8x32xf32>
    %66 = arith.addf %64, %65 : vector<8x32xf32>
    %67 = arith.negf %66 : vector<8x32xf32>
    %68 = math.exp %67 : vector<8x32xf32>
    %cst_36 = arith.constant 1.000000e+00 : f32
    %69 = vector.broadcast %cst_36 : f32 to vector<8x32xf32>
    %70 = arith.addf %69, %68 : vector<8x32xf32>
    %71 = arith.divf %69, %70 : vector<8x32xf32>
    %72 = vector.extract_strided_slice %60 {offsets = [0, 32], sizes = [8, 32], strides = [1, 1]} : vector<8x96xf32> to vector<8x32xf32>
    %73 = vector.extract_strided_slice %63 {offsets = [0, 32], sizes = [8, 32], strides = [1, 1]} : vector<8x96xf32> to vector<8x32xf32>
    %74 = arith.addf %72, %73 : vector<8x32xf32>
    %75 = arith.negf %74 : vector<8x32xf32>
    %76 = math.exp %75 : vector<8x32xf32>
    %cst_37 = arith.constant 1.000000e+00 : f32
    %77 = vector.broadcast %cst_37 : f32 to vector<8x32xf32>
    %78 = arith.addf %77, %76 : vector<8x32xf32>
    %79 = arith.divf %77, %78 : vector<8x32xf32>
    %80 = vector.extract_strided_slice %60 {offsets = [0, 64], sizes = [8, 32], strides = [1, 1]} : vector<8x96xf32> to vector<8x32xf32>
    %81 = vector.extract_strided_slice %63 {offsets = [0, 64], sizes = [8, 32], strides = [1, 1]} : vector<8x96xf32> to vector<8x32xf32>
    %82 = arith.addf %81, %14 : vector<8x32xf32>
    %83 = arith.mulf %71, %82 : vector<8x32xf32>
    %84 = arith.addf %80, %83 : vector<8x32xf32>
    %85 = math.tanh %84 : vector<8x32xf32>
    %cst_38 = arith.constant 1.000000e+00 : f32
    %86 = vector.broadcast %cst_38 : f32 to vector<8x32xf32>
    %87 = arith.subf %86, %79 : vector<8x32xf32>
    %88 = arith.mulf %87, %85 : vector<8x32xf32>
    %89 = arith.mulf %79, %61 : vector<8x32xf32>
    %90 = arith.addf %88, %89 : vector<8x32xf32>
    %c0_39 = arith.constant 0 : index
    %c0_40 = arith.constant 0 : index
    %91 = vector.load %arg10[%c0_39, %c0_40] : memref<8x32xf32, #tpu.memory_space<vmem>>, vector<8x32xf32>
    tpu.vector_store %arg10[%c0_39, %c0_40], %90 {strides = array<i32>} : memref<8x32xf32, #tpu.memory_space<vmem>>, vector<8x32xf32>,
    %92 = arith.index_cast %c1_i32 : i32 to index
    %c0_41 = arith.constant 0 : index
    %c0_42 = arith.constant 0 : index
    %93 = vector.load %arg3[%92, %c0_41, %c0_42] : memref<4x8x1xf32, #tpu.memory_space<vmem>>, vector<1x8x1xf32>
    %94 = vector.shape_cast %93 : vector<1x8x1xf32> to vector<8x1xf32>
    %95 = vector.broadcast %94 : vector<8x1xf32> to vector<8x32xf32>
    %96 = arith.mulf %90, %95 : vector<8x32xf32>
    %97 = arith.index_cast %c1_i32 : i32 to index
    %c0_43 = arith.constant 0 : index
    %c0_44 = arith.constant 0 : index
    %98 = vector.load %arg8[%97, %c0_43, %c0_44] : memref<4x8x32xf32, #tpu.memory_space<vmem>>, vector<1x8x32xf32>
    %99 = vector.shape_cast %98 : vector<1x8x32xf32> to vector<8x32xf32>
    %100 = vector.shape_cast %96 : vector<8x32xf32> to vector<1x8x32xf32>
    tpu.vector_store %arg8[%97, %c0_43, %c0_44], %100 {strides = array<i32>} : memref<4x8x32xf32, #tpu.memory_space<vmem>>, vector<1x8x32xf32>,
    %c2_i32 = arith.constant 2 : i32
    %101 = arith.index_cast %c2_i32 : i32 to index
    %c0_45 = arith.constant 0 : index
    %c0_46 = arith.constant 0 : index
    %102 = vector.load %arg9[%101, %c0_45, %c0_46] : memref<4x8x96xf32, #tpu.memory_space<vmem>>, vector<1x8x96xf32>
    %103 = vector.shape_cast %102 : vector<1x8x96xf32> to vector<8x96xf32>
    %c0_47 = arith.constant 0 : index
    %c0_48 = arith.constant 0 : index
    %104 = vector.load %arg10[%c0_47, %c0_48] : memref<8x32xf32, #tpu.memory_space<vmem>>, vector<8x32xf32>
    %c0_49 = arith.constant 0 : index
    %c0_50 = arith.constant 0 : index
    %105 = vector.load %arg6[%c0_49, %c0_50] : memref<32x96xf32, #tpu.memory_space<vmem>>, vector<32x96xf32>
    %cst_51 = arith.constant dense<0.000000e+00> : vector<8x96xf32>
    %106 = tpu.matmul %104, %105, %cst_51 {dimension_numbers = #tpu.dot_dimension_numbers<[1], [0], [0], [1], [0, 0, 1, 1], [], []>} : vector<8x32xf32>, vector<32x96xf32>, vector<8x96xf32> -> vector<8x96xf32>
    %107 = vector.extract_strided_slice %103 {offsets = [0, 0], sizes = [8, 32], strides = [1, 1]} : vector<8x96xf32> to vector<8x32xf32>
    %108 = vector.extract_strided_slice %106 {offsets = [0, 0], sizes = [8, 32], strides = [1, 1]} : vector<8x96xf32> to vector<8x32xf32>
    %109 = arith.addf %107, %108 : vector<8x32xf32>
    %110 = arith.negf %109 : vector<8x32xf32>
    %111 = math.exp %110 : vector<8x32xf32>
    %cst_52 = arith.constant 1.000000e+00 : f32
    %112 = vector.broadcast %cst_52 : f32 to vector<8x32xf32>
    %113 = arith.addf %112, %111 : vector<8x32xf32>
    %114 = arith.divf %112, %113 : vector<8x32xf32>
    %115 = vector.extract_strided_slice %103 {offsets = [0, 32], sizes = [8, 32], strides = [1, 1]} : vector<8x96xf32> to vector<8x32xf32>
    %116 = vector.extract_strided_slice %106 {offsets = [0, 32], sizes = [8, 32], strides = [1, 1]} : vector<8x96xf32> to vector<8x32xf32>
    %117 = arith.addf %115, %116 : vector<8x32xf32>
    %118 = arith.negf %117 : vector<8x32xf32>
    %119 = math.exp %118 : vector<8x32xf32>
    %cst_53 = arith.constant 1.000000e+00 : f32
    %120 = vector.broadcast %cst_53 : f32 to vector<8x32xf32>
    %121 = arith.addf %120, %119 : vector<8x32xf32>
    %122 = arith.divf %120, %121 : vector<8x32xf32>
    %123 = vector.extract_strided_slice %103 {offsets = [0, 64], sizes = [8, 32], strides = [1, 1]} : vector<8x96xf32> to vector<8x32xf32>
    %124 = vector.extract_strided_slice %106 {offsets = [0, 64], sizes = [8, 32], strides = [1, 1]} : vector<8x96xf32> to vector<8x32xf32>
    %125 = arith.addf %124, %14 : vector<8x32xf32>
    %126 = arith.mulf %114, %125 : vector<8x32xf32>
    %127 = arith.addf %123, %126 : vector<8x32xf32>
    %128 = math.tanh %127 : vector<8x32xf32>
    %cst_54 = arith.constant 1.000000e+00 : f32
    %129 = vector.broadcast %cst_54 : f32 to vector<8x32xf32>
    %130 = arith.subf %129, %122 : vector<8x32xf32>
    %131 = arith.mulf %130, %128 : vector<8x32xf32>
    %132 = arith.mulf %122, %104 : vector<8x32xf32>
    %133 = arith.addf %131, %132 : vector<8x32xf32>
    %c0_55 = arith.constant 0 : index
    %c0_56 = arith.constant 0 : index
    %134 = vector.load %arg10[%c0_55, %c0_56] : memref<8x32xf32, #tpu.memory_space<vmem>>, vector<8x32xf32>
    tpu.vector_store %arg10[%c0_55, %c0_56], %133 {strides = array<i32>} : memref<8x32xf32, #tpu.memory_space<vmem>>, vector<8x32xf32>,
    %135 = arith.index_cast %c2_i32 : i32 to index
    %c0_57 = arith.constant 0 : index
    %c0_58 = arith.constant 0 : index
    %136 = vector.load %arg3[%135, %c0_57, %c0_58] : memref<4x8x1xf32, #tpu.memory_space<vmem>>, vector<1x8x1xf32>
    %137 = vector.shape_cast %136 : vector<1x8x1xf32> to vector<8x1xf32>
    %138 = vector.broadcast %137 : vector<8x1xf32> to vector<8x32xf32>
    %139 = arith.mulf %133, %138 : vector<8x32xf32>
    %140 = arith.index_cast %c2_i32 : i32 to index
    %c0_59 = arith.constant 0 : index
    %c0_60 = arith.constant 0 : index
    %141 = vector.load %arg8[%140, %c0_59, %c0_60] : memref<4x8x32xf32, #tpu.memory_space<vmem>>, vector<1x8x32xf32>
    %142 = vector.shape_cast %141 : vector<1x8x32xf32> to vector<8x32xf32>
    %143 = vector.shape_cast %139 : vector<8x32xf32> to vector<1x8x32xf32>
    tpu.vector_store %arg8[%140, %c0_59, %c0_60], %143 {strides = array<i32>} : memref<4x8x32xf32, #tpu.memory_space<vmem>>, vector<1x8x32xf32>,
    %c3_i32 = arith.constant 3 : i32
    %144 = arith.index_cast %c3_i32 : i32 to index
    %c0_61 = arith.constant 0 : index
    %c0_62 = arith.constant 0 : index
    %145 = vector.load %arg9[%144, %c0_61, %c0_62] : memref<4x8x96xf32, #tpu.memory_space<vmem>>, vector<1x8x96xf32>
    %146 = vector.shape_cast %145 : vector<1x8x96xf32> to vector<8x96xf32>
    %c0_63 = arith.constant 0 : index
    %c0_64 = arith.constant 0 : index
    %147 = vector.load %arg10[%c0_63, %c0_64] : memref<8x32xf32, #tpu.memory_space<vmem>>, vector<8x32xf32>
    %c0_65 = arith.constant 0 : index
    %c0_66 = arith.constant 0 : index
    %148 = vector.load %arg6[%c0_65, %c0_66] : memref<32x96xf32, #tpu.memory_space<vmem>>, vector<32x96xf32>
    %cst_67 = arith.constant dense<0.000000e+00> : vector<8x96xf32>
    %149 = tpu.matmul %147, %148, %cst_67 {dimension_numbers = #tpu.dot_dimension_numbers<[1], [0], [0], [1], [0, 0, 1, 1], [], []>} : vector<8x32xf32>, vector<32x96xf32>, vector<8x96xf32> -> vector<8x96xf32>
    %150 = vector.extract_strided_slice %146 {offsets = [0, 0], sizes = [8, 32], strides = [1, 1]} : vector<8x96xf32> to vector<8x32xf32>
    %151 = vector.extract_strided_slice %149 {offsets = [0, 0], sizes = [8, 32], strides = [1, 1]} : vector<8x96xf32> to vector<8x32xf32>
    %152 = arith.addf %150, %151 : vector<8x32xf32>
    %153 = arith.negf %152 : vector<8x32xf32>
    %154 = math.exp %153 : vector<8x32xf32>
    %cst_68 = arith.constant 1.000000e+00 : f32
    %155 = vector.broadcast %cst_68 : f32 to vector<8x32xf32>
    %156 = arith.addf %155, %154 : vector<8x32xf32>
    %157 = arith.divf %155, %156 : vector<8x32xf32>
    %158 = vector.extract_strided_slice %146 {offsets = [0, 32], sizes = [8, 32], strides = [1, 1]} : vector<8x96xf32> to vector<8x32xf32>
    %159 = vector.extract_strided_slice %149 {offsets = [0, 32], sizes = [8, 32], strides = [1, 1]} : vector<8x96xf32> to vector<8x32xf32>
    %160 = arith.addf %158, %159 : vector<8x32xf32>
    %161 = arith.negf %160 : vector<8x32xf32>
    %162 = math.exp %161 : vector<8x32xf32>
    %cst_69 = arith.constant 1.000000e+00 : f32
    %163 = vector.broadcast %cst_69 : f32 to vector<8x32xf32>
    %164 = arith.addf %163, %162 : vector<8x32xf32>
    %165 = arith.divf %163, %164 : vector<8x32xf32>
    %166 = vector.extract_strided_slice %146 {offsets = [0, 64], sizes = [8, 32], strides = [1, 1]} : vector<8x96xf32> to vector<8x32xf32>
    %167 = vector.extract_strided_slice %149 {offsets = [0, 64], sizes = [8, 32], strides = [1, 1]} : vector<8x96xf32> to vector<8x32xf32>
    %168 = arith.addf %167, %14 : vector<8x32xf32>
    %169 = arith.mulf %157, %168 : vector<8x32xf32>
    %170 = arith.addf %166, %169 : vector<8x32xf32>
    %171 = math.tanh %170 : vector<8x32xf32>
    %cst_70 = arith.constant 1.000000e+00 : f32
    %172 = vector.broadcast %cst_70 : f32 to vector<8x32xf32>
    %173 = arith.subf %172, %165 : vector<8x32xf32>
    %174 = arith.mulf %173, %171 : vector<8x32xf32>
    %175 = arith.mulf %165, %147 : vector<8x32xf32>
    %176 = arith.addf %174, %175 : vector<8x32xf32>
    %c0_71 = arith.constant 0 : index
    %c0_72 = arith.constant 0 : index
    %177 = vector.load %arg10[%c0_71, %c0_72] : memref<8x32xf32, #tpu.memory_space<vmem>>, vector<8x32xf32>
    tpu.vector_store %arg10[%c0_71, %c0_72], %176 {strides = array<i32>} : memref<8x32xf32, #tpu.memory_space<vmem>>, vector<8x32xf32>,
    %178 = arith.index_cast %c3_i32 : i32 to index
    %c0_73 = arith.constant 0 : index
    %c0_74 = arith.constant 0 : index
    %179 = vector.load %arg3[%178, %c0_73, %c0_74] : memref<4x8x1xf32, #tpu.memory_space<vmem>>, vector<1x8x1xf32>
    %180 = vector.shape_cast %179 : vector<1x8x1xf32> to vector<8x1xf32>
    %181 = vector.broadcast %180 : vector<8x1xf32> to vector<8x32xf32>
    %182 = arith.mulf %176, %181 : vector<8x32xf32>
    %183 = arith.index_cast %c3_i32 : i32 to index
    %c0_75 = arith.constant 0 : index
    %c0_76 = arith.constant 0 : index
    %184 = vector.load %arg8[%183, %c0_75, %c0_76] : memref<4x8x32xf32, #tpu.memory_space<vmem>>, vector<1x8x32xf32>
    %185 = vector.shape_cast %184 : vector<1x8x32xf32> to vector<8x32xf32>
    %186 = vector.shape_cast %182 : vector<8x32xf32> to vector<1x8x32xf32>
    tpu.vector_store %arg8[%183, %c0_75, %c0_76], %186 {strides = array<i32>} : memref<4x8x32xf32, #tpu.memory_space<vmem>>, vector<1x8x32xf32>,
    %c4_i32 = arith.constant 4 : i32
    return
  }
  func.func @transform_0(%arg0: i32, %arg1: i32) -> (i32, i32, i32) {
    %c0_i32 = arith.constant 0 : i32
    %c0_i32_0 = arith.constant 0 : i32
    return %arg1, %arg0, %c0_i32 : i32, i32, i32
  }
  func.func @transform_1(%arg0: i32, %arg1: i32) -> (i32, i32, i32) {
    %c0_i32 = arith.constant 0 : i32
    %c0_i32_0 = arith.constant 0 : i32
    return %arg1, %arg0, %c0_i32 : i32, i32, i32
  }
  func.func @transform_2(%arg0: i32, %arg1: i32) -> (i32, i32) {
    %c0_i32 = arith.constant 0 : i32
    %c0_i32_0 = arith.constant 0 : i32
    %c0_i32_1 = arith.constant 0 : i32
    return %c0_i32, %c0_i32_0 : i32, i32
  }
  func.func @transform_3(%arg0: i32, %arg1: i32) -> (i32, i32) {
    %c0_i32 = arith.constant 0 : i32
    %c0_i32_0 = arith.constant 0 : i32
    %c0_i32_1 = arith.constant 0 : i32
    return %c0_i32, %c0_i32_0 : i32, i32
  }
  func.func @transform_4(%arg0: i32, %arg1: i32) -> (i32, i32) {
    %c0_i32 = arith.constant 0 : i32
    %c0_i32_0 = arith.constant 0 : i32
    %c0_i32_1 = arith.constant 0 : i32
    return %c0_i32, %c0_i32_0 : i32, i32
  }
  func.func @transform_5(%arg0: i32, %arg1: i32) -> (i32, i32) {
    %c0_i32 = arith.constant 0 : i32
    %c0_i32_0 = arith.constant 0 : i32
    %c0_i32_1 = arith.constant 0 : i32
    return %c0_i32, %c0_i32_0 : i32, i32
  }
  func.func @transform_6(%arg0: i32, %arg1: i32) -> (i32, i32, i32) {
    %c0_i32 = arith.constant 0 : i32
    %c0_i32_0 = arith.constant 0 : i32
    return %arg1, %arg0, %c0_i32 : i32, i32, i32
  }
}

module attributes {stable_mosaic.version = 11 : i64} {
  func.func @_pred_head_kernel(%arg0: i32, %arg1: memref<32x32xf32, #tpu.memory_space<vmem>>, %arg2: memref<32x1xf32, #tpu.memory_space<vmem>>, %arg3: memref<32x32xf32, #tpu.memory_space<vmem>>, %arg4: memref<1x32xf32, #tpu.memory_space<vmem>>, %arg5: memref<1x32xf32, #tpu.memory_space<vmem>>, %arg6: memref<1x32xf32, #tpu.memory_space<vmem>>, %arg7: memref<1x32xf32, #tpu.memory_space<vmem>>, %arg8: memref<1x1xf32, #tpu.memory_space<vmem>>, %arg9: memref<32x1xf32, #tpu.memory_space<vmem>>) attributes {dimension_semantics = [#tpu.dimension_semantics<parallel>], iteration_bounds = array<i64: 2>, scalar_prefetch = 0 : i64, scratch_operands = 0 : i64, tpu.core_type = #tpu.core_type<tc>, window_params = [{transform_indices = @transform_0, window_bounds = array<i64: 32, 32>}, {transform_indices = @transform_1, window_bounds = array<i64: 32, 1>}, {pipeline_mode = #tpu.pipeline_mode<synchronous>, transform_indices = @transform_2, window_bounds = array<i64: 32, 32>}, {pipeline_mode = #tpu.pipeline_mode<synchronous>, transform_indices = @transform_3, window_bounds = array<i64: 1, 32>}, {pipeline_mode = #tpu.pipeline_mode<synchronous>, transform_indices = @transform_4, window_bounds = array<i64: 1, 32>}, {pipeline_mode = #tpu.pipeline_mode<synchronous>, transform_indices = @transform_5, window_bounds = array<i64: 1, 32>}, {pipeline_mode = #tpu.pipeline_mode<synchronous>, transform_indices = @transform_6, window_bounds = array<i64: 1, 32>}, {pipeline_mode = #tpu.pipeline_mode<synchronous>, transform_indices = @transform_7, window_bounds = array<i64: 1, 1>}, {transform_indices = @transform_8, window_bounds = array<i64: 32, 1>}]} {
    %c0 = arith.constant 0 : index
    %c0_0 = arith.constant 0 : index
    %0 = vector.load %arg1[%c0, %c0_0] : memref<32x32xf32, #tpu.memory_space<vmem>>, vector<32x32xf32>
    %c0_1 = arith.constant 0 : index
    %c0_2 = arith.constant 0 : index
    %1 = vector.load %arg3[%c0_1, %c0_2] : memref<32x32xf32, #tpu.memory_space<vmem>>, vector<32x32xf32>
    %cst = arith.constant dense<0.000000e+00> : vector<32x32xf32>
    %2 = tpu.matmul %0, %1, %cst {dimension_numbers = #tpu.dot_dimension_numbers<[1], [0], [0], [1], [0, 0, 1, 1], [], []>} : vector<32x32xf32>, vector<32x32xf32>, vector<32x32xf32> -> vector<32x32xf32>
    %c0_3 = arith.constant 0 : index
    %c0_4 = arith.constant 0 : index
    %3 = vector.load %arg4[%c0_3, %c0_4] : memref<1x32xf32, #tpu.memory_space<vmem>>, vector<1x32xf32>
    %4 = vector.broadcast %3 : vector<1x32xf32> to vector<32x32xf32>
    %5 = arith.addf %2, %4 : vector<32x32xf32>
    %cst_5 = arith.constant dense<0.000000e+00> : vector<32xf32>
    %6 = vector.multi_reduction <add>, %5, %cst_5 [1] : vector<32x32xf32> to vector<32xf32>
    %7 = vector.shape_cast %6 : vector<32xf32> to vector<32x1xf32>
    %cst_6 = arith.constant 3.200000e+01 : f32
    %8 = vector.broadcast %cst_6 : f32 to vector<32x1xf32>
    %9 = arith.divf %7, %8 : vector<32x1xf32>
    %10 = vector.broadcast %9 : vector<32x1xf32> to vector<32x32xf32>
    %11 = arith.subf %5, %10 : vector<32x32xf32>
    %12 = arith.mulf %11, %11 : vector<32x32xf32>
    %cst_7 = arith.constant dense<0.000000e+00> : vector<32xf32>
    %13 = vector.multi_reduction <add>, %12, %cst_7 [1] : vector<32x32xf32> to vector<32xf32>
    %14 = vector.shape_cast %13 : vector<32xf32> to vector<32x1xf32>
    %cst_8 = arith.constant 3.200000e+01 : f32
    %15 = vector.broadcast %cst_8 : f32 to vector<32x1xf32>
    %16 = arith.divf %14, %15 : vector<32x1xf32>
    %17 = vector.broadcast %9 : vector<32x1xf32> to vector<32x32xf32>
    %18 = arith.subf %5, %17 : vector<32x32xf32>
    %cst_9 = arith.constant 9.99999997E-7 : f32
    %19 = vector.broadcast %cst_9 : f32 to vector<32x1xf32>
    %20 = arith.addf %16, %19 : vector<32x1xf32>
    %21 = math.rsqrt %20 : vector<32x1xf32>
    %22 = vector.broadcast %21 : vector<32x1xf32> to vector<32x32xf32>
    %23 = arith.mulf %18, %22 : vector<32x32xf32>
    %c0_10 = arith.constant 0 : index
    %c0_11 = arith.constant 0 : index
    %24 = vector.load %arg5[%c0_10, %c0_11] : memref<1x32xf32, #tpu.memory_space<vmem>>, vector<1x32xf32>
    %25 = vector.broadcast %24 : vector<1x32xf32> to vector<32x32xf32>
    %26 = arith.mulf %23, %25 : vector<32x32xf32>
    %c0_12 = arith.constant 0 : index
    %c0_13 = arith.constant 0 : index
    %27 = vector.load %arg6[%c0_12, %c0_13] : memref<1x32xf32, #tpu.memory_space<vmem>>, vector<1x32xf32>
    %28 = vector.broadcast %27 : vector<1x32xf32> to vector<32x32xf32>
    %29 = arith.addf %26, %28 : vector<32x32xf32>
    %cst_14 = arith.constant 0.000000e+00 : f32
    %30 = vector.broadcast %cst_14 : f32 to vector<32x32xf32>
    %31 = arith.maximumf %29, %30 : vector<32x32xf32>
    %c0_15 = arith.constant 0 : index
    %c0_16 = arith.constant 0 : index
    %32 = vector.load %arg7[%c0_15, %c0_16] : memref<1x32xf32, #tpu.memory_space<vmem>>, vector<1x32xf32>
    %33 = vector.broadcast %32 : vector<1x32xf32> to vector<32x32xf32>
    %34 = arith.mulf %31, %33 : vector<32x32xf32>
    %cst_17 = arith.constant dense<0.000000e+00> : vector<32xf32>
    %35 = vector.multi_reduction <add>, %34, %cst_17 [1] : vector<32x32xf32> to vector<32xf32>
    %36 = vector.shape_cast %35 : vector<32xf32> to vector<32x1xf32>
    %c0_18 = arith.constant 0 : index
    %c0_19 = arith.constant 0 : index
    %37 = vector.load %arg8[%c0_18, %c0_19] : memref<1x1xf32, #tpu.memory_space<vmem>>, vector<1x1xf32>
    %38 = vector.broadcast %37 : vector<1x1xf32> to vector<32x1xf32>
    %39 = arith.addf %36, %38 : vector<32x1xf32>
    %c0_20 = arith.constant 0 : index
    %c0_21 = arith.constant 0 : index
    %40 = vector.load %arg2[%c0_20, %c0_21] : memref<32x1xf32, #tpu.memory_space<vmem>>, vector<32x1xf32>
    %cst_22 = arith.constant 1.000000e+00 : f32
    %41 = vector.broadcast %cst_22 : f32 to vector<32x1xf32>
    %42 = arith.subf %41, %40 : vector<32x1xf32>
    %cst_23 = arith.constant -1.000000e+30 : f32
    %43 = vector.broadcast %cst_23 : f32 to vector<32x1xf32>
    %44 = arith.mulf %42, %43 : vector<32x1xf32>
    %45 = arith.addf %39, %44 : vector<32x1xf32>
    %c0_24 = arith.constant 0 : index
    %c0_25 = arith.constant 0 : index
    %46 = vector.load %arg9[%c0_24, %c0_25] : memref<32x1xf32, #tpu.memory_space<vmem>>, vector<32x1xf32>
    tpu.vector_store %arg9[%c0_24, %c0_25], %45 {strides = array<i32>} : memref<32x1xf32, #tpu.memory_space<vmem>>, vector<32x1xf32>,
    return
  }
  func.func @transform_0(%arg0: i32) -> (i32, i32) {
    %c0_i32 = arith.constant 0 : i32
    %c0_i32_0 = arith.constant 0 : i32
    return %arg0, %c0_i32 : i32, i32
  }
  func.func @transform_1(%arg0: i32) -> (i32, i32) {
    %c0_i32 = arith.constant 0 : i32
    %c0_i32_0 = arith.constant 0 : i32
    return %arg0, %c0_i32 : i32, i32
  }
  func.func @transform_2(%arg0: i32) -> (i32, i32) {
    %c0_i32 = arith.constant 0 : i32
    %c0_i32_0 = arith.constant 0 : i32
    %c0_i32_1 = arith.constant 0 : i32
    return %c0_i32, %c0_i32_0 : i32, i32
  }
  func.func @transform_3(%arg0: i32) -> (i32, i32) {
    %c0_i32 = arith.constant 0 : i32
    %c0_i32_0 = arith.constant 0 : i32
    %c0_i32_1 = arith.constant 0 : i32
    return %c0_i32, %c0_i32_0 : i32, i32
  }
  func.func @transform_4(%arg0: i32) -> (i32, i32) {
    %c0_i32 = arith.constant 0 : i32
    %c0_i32_0 = arith.constant 0 : i32
    %c0_i32_1 = arith.constant 0 : i32
    return %c0_i32, %c0_i32_0 : i32, i32
  }
  func.func @transform_5(%arg0: i32) -> (i32, i32) {
    %c0_i32 = arith.constant 0 : i32
    %c0_i32_0 = arith.constant 0 : i32
    %c0_i32_1 = arith.constant 0 : i32
    return %c0_i32, %c0_i32_0 : i32, i32
  }
  func.func @transform_6(%arg0: i32) -> (i32, i32) {
    %c0_i32 = arith.constant 0 : i32
    %c0_i32_0 = arith.constant 0 : i32
    %c0_i32_1 = arith.constant 0 : i32
    return %c0_i32, %c0_i32_0 : i32, i32
  }
  func.func @transform_7(%arg0: i32) -> (i32, i32) {
    %c0_i32 = arith.constant 0 : i32
    %c0_i32_0 = arith.constant 0 : i32
    %c0_i32_1 = arith.constant 0 : i32
    return %c0_i32, %c0_i32_0 : i32, i32
  }
  func.func @transform_8(%arg0: i32) -> (i32, i32) {
    %c0_i32 = arith.constant 0 : i32
    %c0_i32_0 = arith.constant 0 : i32
    return %arg0, %c0_i32 : i32, i32
  }
}

</mosaic_0001>

<llo_original>
// kernel: common_predictor_forward.4
$region0: #{common_predictor_forward.4}
  #allocation0 [shape = 'u32[]', space=smem, size = 0x4, offset = 0x4, fixed_abs, tag = 'smem constant byte address 0x4 - core index']
  #allocation1 [shape = 'u32[144,128]{1,0:T(1,128)}', space=vmem, size = 0x12000, scoped, tag = 'internal scratch']
  #allocation2 [shape = 'f32[4,8,96]{2,1,0:T(8,128)}', space=vmem, size = 0x4000, scoped, tag = 'scratch operand']
  #allocation3 [shape = 'f32[8,32]{1,0:T(8,128)}', space=vmem, size = 0x1000, scoped, tag = 'scratch operand']
  %s0 = inlined_call_operand.vmem [shape: f32[8,8,32], index: 0, kind: input, shape index: {}]
  %s1 = inlined_call_operand.vmem [shape: f32[8,8,1], index: 1, kind: input, shape index: {}]
  %s2 = inlined_call_operand.vmem [shape: f32[32,96], index: 2, kind: input, shape index: {}]
  %s3 = inlined_call_operand.vmem [shape: f32[1,96], index: 3, kind: input, shape index: {}]
  %s4 = inlined_call_operand.vmem [shape: f32[32,96], index: 4, kind: input, shape index: {}]
  %s5 = inlined_call_operand.vmem [shape: f32[1,32], index: 5, kind: input, shape index: {}]
  %s6 = inlined_call_operand.vmem [shape: f32[8,8,32], index: 6, kind: output, shape index: {}]
  %s7 = sld [smem:[#allocation0]]
  $region61: #{common_predictor_forward.4} parent=0
    _
  %s9 = ssub.s32 1, %s7
  %s10 = scalar_select 0, %s9, %s7
  loop: start=0, step=1, limit=4
  $region2: #{common_predictor_forward.4} parent=0 // loop_pre_header
    _
  $region3: #{common_predictor_forward.4} parent=0 // loop_header
    %s12 = sphi 0, %s16
    %p13 = scmp.ge.s32.totalorder %s12, 4
    %s19 = sphi 0, %s31
    %s20 = sphi 0, %s27
    %s21 = sphi 0, %s19
    %s22 = sphi 0, %s20
    %s23 = sphi 0, %s21
    %s24 = sphi 0, %s22
    %s36 = sphi 0, %s38
    %s39 = sphi 0, %s36
    %s40 = sphi 0, %s39
    %s56 = sphi 0, %s40
    %s64 = sphi 0, %s66
    %s67 = sphi 0, %s64
    %s68 = sphi 0, %s67
    %s84 = sphi 0, %s68
    %s88 = sphi 0, %s88
    %s90 = sphi 0, %s88
    %s91 = sphi 0, %s90
    %s105 = sphi 0, %s91
    %s109 = sphi 0, %s109
    %s111 = sphi 0, %s109
    %s112 = sphi 0, %s111
    %s126 = sphi 0, %s112
    %s130 = sphi 0, %s130
    %s132 = sphi 0, %s130
    %s133 = sphi 0, %s132
    %s147 = sphi 0, %s133
    %s151 = sphi 0, %s151
    %s153 = sphi 0, %s151
    %s154 = sphi 0, %s153
    %s168 = sphi 0, %s154
    %s176 = sphi 0, %s178
    %s179 = sphi 0, %s176
    %s180 = sphi 0, %s179
    %s196 = sphi 0, %s180
  $region4: #{common_predictor_forward.4} parent=0 // loop_header_branch
    %15 = sbr.rel (%p13) target = $region8
  $region5: #{common_predictor_forward.4} parent=0 // loop_body
    %s17 = ssub.s32 %s12, 1
    %s18 = ssub.s32 %s12, 2
    %s25 = sadd.s32 1, %s20
    %p26 = scmp.ge.s32.totalorder %s25, 2
    %s27 = scalar_select %p26, 0, %s25
    %s28 = sadd.s32 1, %s19
    %s29 = scalar_select %p26, %s28, %s19
    %p30 = scmp.ge.s32.totalorder %s29, 1
    %s31 = scalar_select %p30, 0, %s29
    %s32 = ssub.s32 %s20, %s27
    %s33 = ssub.s32 %s19, %s31
    %s34 = sor.u32 %s32, %s33
    %p35 = scmp.eq.s32.totalorder %s34, 0
    %s37 = sadd.s32 %s36, 1
    %s38 = scalar_select %p35, %s36, %s37
    %p41 = pneg %p35
    %p42 = scmp.eq.s32.totalorder %s12, 1
    %p43 = por %p41, %p42
    %p44 = scmp.ne.s32.totalorder %s36, %s39
    %p45 = scmp.eq.s32.totalorder %s12, 0
    %p46 = por %p44, %p45
    %p47 = scmp.ne.s32.totalorder %s36, %s39
    %p48 = scmp.eq.s32.totalorder %s17, 1
    %p49 = por %p47, %p48
    %p50 = scmp.ne.s32.totalorder %s39, %s40
    %p51 = scmp.eq.s32.totalorder %s17, 0
    %p52 = por %p50, %p51
    %p53 = scmp.ne.s32.totalorder %s39, %s40
    %p54 = scmp.eq.s32.totalorder %s18, 1
    %p55 = por %p53, %p54
    %p57 = scmp.ne.s32.totalorder %s40, %s56
    %p58 = scmp.eq.s32.totalorder %s18, 0
    %p59 = por %p57, %p58
    %s60 = ssub.s32 %s20, %s27
    %s61 = ssub.s32 %s19, %s31
    %s62 = sor.u32 %s60, %s61
    %p63 = scmp.eq.s32.totalorder %s62, 0
    %s65 = sadd.s32 %s64, 1
    %s66 = scalar_select %p63, %s64, %s65
    %p69 = pneg %p63
    %p70 = scmp.eq.s32.totalorder %s12, 1
    %p71 = por %p69, %p70
    %p72 = scmp.ne.s32.totalorder %s64, %s67
    %p73 = scmp.eq.s32.totalorder %s12, 0
    %p74 = por %p72, %p73
    %p75 = scmp.ne.s32.totalorder %s64, %s67
    %p76 = scmp.eq.s32.totalorder %s17, 1
    %p77 = por %p75, %p76
    %p78 = scmp.ne.s32.totalorder %s67, %s68
    %p79 = scmp.eq.s32.totalorder %s17, 0
    %p80 = por %p78, %p79
    %p81 = scmp.ne.s32.totalorder %s67, %s68
    %p82 = scmp.eq.s32.totalorder %s18, 1
    %p83 = por %p81, %p82
    %p85 = scmp.ne.s32.totalorder %s68, %s84
    %p86 = scmp.eq.s32.totalorder %s18, 0
    %p87 = por %p85, %p86
    %s89 = sadd.s32 %s88, 1
    %p92 = scmp.eq.s32.totalorder %s12, 1
    %p93 = scmp.ne.s32.totalorder %s88, %s90
    %p94 = scmp.eq.s32.totalorder %s12, 0
    %p95 = por %p93, %p94
    %p96 = scmp.ne.s32.totalorder %s88, %s90
    %p97 = scmp.eq.s32.totalorder %s17, 1
    %p98 = por %p96, %p97
    %p99 = scmp.ne.s32.totalorder %s90, %s91
    %p100 = scmp.eq.s32.totalorder %s17, 0
    %p101 = por %p99, %p100
    %p102 = scmp.ne.s32.totalorder %s90, %s91
    %p103 = scmp.eq.s32.totalorder %s18, 1
    %p104 = por %p102, %p103
    %p106 = scmp.ne.s32.totalorder %s91, %s105
    %p107 = scmp.eq.s32.totalorder %s18, 0
    %p108 = por %p106, %p107
    %s110 = sadd.s32 %s109, 1
    %p113 = scmp.eq.s32.totalorder %s12, 1
    %p114 = scmp.ne.s32.totalorder %s109, %s111
    %p115 = scmp.eq.s32.totalorder %s12, 0
    %p116 = por %p114, %p115
    %p117 = scmp.ne.s32.totalorder %s109, %s111
    %p118 = scmp.eq.s32.totalorder %s17, 1
    %p119 = por %p117, %p118
    %p120 = scmp.ne.s32.totalorder %s111, %s112
    %p121 = scmp.eq.s32.totalorder %s17, 0
    %p122 = por %p120, %p121
    %p123 = scmp.ne.s32.totalorder %s111, %s112
    %p124 = scmp.eq.s32.totalorder %s18, 1
    %p125 = por %p123, %p124
    %p127 = scmp.ne.s32.totalorder %s112, %s126
    %p128 = scmp.eq.s32.totalorder %s18, 0
    %p129 = por %p127, %p128
    %s131 = sadd.s32 %s130, 1
    %p134 = scmp.eq.s32.totalorder %s12, 1
    %p135 = scmp.ne.s32.totalorder %s130, %s132
    %p136 = scmp.eq.s32.totalorder %s12, 0
    %p137 = por %p135, %p136
    %p138 = scmp.ne.s32.totalorder %s130, %s132
    %p139 = scmp.eq.s32.totalorder %s17, 1
    %p140 = por %p138, %p139
    %p141 = scmp.ne.s32.totalorder %s132, %s133
    %p142 = scmp.eq.s32.totalorder %s17, 0
    %p143 = por %p141, %p142
    %p144 = scmp.ne.s32.totalorder %s132, %s133
    %p145 = scmp.eq.s32.totalorder %s18, 1
    %p146 = por %p144, %p145
    %p148 = scmp.ne.s32.totalorder %s133, %s147
    %p149 = scmp.eq.s32.totalorder %s18, 0
    %p150 = por %p148, %p149
    %s152 = sadd.s32 %s151, 1
    %p155 = scmp.eq.s32.totalorder %s12, 1
    %p156 = scmp.ne.s32.totalorder %s151, %s153
    %p157 = scmp.eq.s32.totalorder %s12, 0
    %p158 = por %p156, %p157
    %p159 = scmp.ne.s32.totalorder %s151, %s153
    %p160 = scmp.eq.s32.totalorder %s17, 1
    %p161 = por %p159, %p160
    %p162 = scmp.ne.s32.totalorder %s153, %s154
    %p163 = scmp.eq.s32.totalorder %s17, 0
    %p164 = por %p162, %p163
    %p165 = scmp.ne.s32.totalorder %s153, %s154
    %p166 = scmp.eq.s32.totalorder %s18, 1
    %p167 = por %p165, %p166
    %p169 = scmp.ne.s32.totalorder %s154, %s168
    %p170 = scmp.eq.s32.totalorder %s18, 0
    %p171 = por %p169, %p170
    %s172 = ssub.s32 %s20, %s27
    %s173 = ssub.s32 %s19, %s31
    %s174 = sor.u32 %s172, %s173
    %p175 = scmp.eq.s32.totalorder %s174, 0
    %s177 = sadd.s32 %s176, 1
    %s178 = scalar_select %p175, %s176, %s177
    %p181 = pneg %p175
    %p182 = scmp.eq.s32.totalorder %s12, 1
    %p183 = por %p181, %p182
    %p184 = scmp.ne.s32.totalorder %s176, %s179
    %p185 = scmp.eq.s32.totalorder %s12, 0
    %p186 = por %p184, %p185
    %p187 = scmp.ne.s32.totalorder %s176, %s179
    %p188 = scmp.eq.s32.totalorder %s17, 1
    %p189 = por %p187, %p188
    %p190 = scmp.ne.s32.totalorder %s179, %s180
    %p191 = scmp.eq.s32.totalorder %s17, 0
    %p192 = por %p190, %p191
    %p193 = scmp.ne.s32.totalorder %s179, %s180
    %p194 = scmp.eq.s32.totalorder %s18, 1
    %p195 = por %p193, %p194
    %p197 = scmp.ne.s32.totalorder %s180, %s196
    %p198 = scmp.eq.s32.totalorder %s18, 0
    %p199 = por %p197, %p198
    %p200 = scmp.le.s32.totalorder 1, %s12
    %p201 = scmp.lt.s32.totalorder %s12, 3
    %p202 = pnand %p200, %p201
    %p203 = pneg %p202
    // Predicated region
    $region9: #{common_predictor_forward.4} parent=5 // pred_check
      _
    $region10: #{common_predictor_forward.4} parent=5 // pred_check_branch
      %205 = sbr.rel (%p202) target = $region12
    $region11: #{common_predictor_forward.4} parent=5 // pred_region
      %s206 = ssub.s32 %s12, 1
      // Predicated region
      $region13: #{common_predictor_forward.4} parent=11 // pred_check
        %p207 = pneg %p101
      $region14: #{common_predictor_forward.4} parent=11 // pred_check_branch
        %209 = sbr.rel (%p207) target = $region16
      $region15: #{common_predictor_forward.4} parent=11 // pred_region
        _
      $region16: #{common_predictor_forward.4} parent=11 // pred_fallthru
        _
      // Predicated region
      $region17: #{common_predictor_forward.4} parent=11 // pred_check
        %p210 = pneg %p122
      $region18: #{common_predictor_forward.4} parent=11 // pred_check_branch
        %212 = sbr.rel (%p210) target = $region20
      $region19: #{common_predictor_forward.4} parent=11 // pred_region
        _
      $region20: #{common_predictor_forward.4} parent=11 // pred_fallthru
        _
      // Predicated region
      $region21: #{common_predictor_forward.4} parent=11 // pred_check
        %p213 = pneg %p143
      $region22: #{common_predictor_forward.4} parent=11 // pred_check_branch
        %215 = sbr.rel (%p213) target = $region24
      $region23: #{common_predictor_forward.4} parent=11 // pred_region
        _
      $region24: #{common_predictor_forward.4} parent=11 // pred_fallthru
        _
      // Predicated region
      $region25: #{common_predictor_forward.4} parent=11 // pred_check
        %p216 = pneg %p164
      $region26: #{common_predictor_forward.4} parent=11 // pred_check_branch
        %218 = sbr.rel (%p216) target = $region28
      $region27: #{common_predictor_forward.4} parent=11 // pred_region
        _
      $region28: #{common_predictor_forward.4} parent=11 // pred_fallthru
        _
    $region12: #{common_predictor_forward.4} parent=5 // pred_fallthru
      _
    %p219 = scmp.lt.s32.totalorder %s12, 2
    // Predicated region
    $region29: #{common_predictor_forward.4} parent=5 // pred_check
      %p220 = pneg %p219
    $region30: #{common_predictor_forward.4} parent=5 // pred_check_branch
      %222 = sbr.rel (%p220) target = $region32
    $region31: #{common_predictor_forward.4} parent=5 // pred_region
      // Predicated region
      $region33: #{common_predictor_forward.4} parent=31 // pred_check
        %p223 = pneg %p46
      $region34: #{common_predictor_forward.4} parent=31 // pred_check_branch
        %225 = sbr.rel (%p223) target = $region36
      $region35: #{common_predictor_forward.4} parent=31 // pred_region
        %s226 = smul.u32 4, %s20
        %p227 = scmp.lt.s32.totalorder %s226, 7
        %s228 = scalar_select %p227, %s226, 7
        %p229 = scmp.lt.s32.totalorder %s19, 0
        %s230 = scalar_select %p229, %s19, 0
        %s231 = sadd.s32 %s230, %s228
        %s232 = smul.addr %s231, 8
        %s233 = scalar_lea.vmem %s0, %s232
        %s234 = smul.u32 4, %s20
      $region36: #{common_predictor_forward.4} parent=31 // pred_fallthru
        _
      // Predicated region
      $region37: #{common_predictor_forward.4} parent=31 // pred_check
        %p235 = pneg %p74
      $region38: #{common_predictor_forward.4} parent=31 // pred_check_branch
        %237 = sbr.rel (%p235) target = $region40
      $region39: #{common_predictor_forward.4} parent=31 // pred_region
        %s238 = smul.u32 4, %s20
        %p239 = scmp.lt.s32.totalorder %s238, 7
        %s240 = scalar_select %p239, %s238, 7
        %p241 = scmp.lt.s32.totalorder %s19, 0
        %s242 = scalar_select %p241, %s19, 0
        %s243 = sadd.s32 %s242, %s240
        %s244 = smul.addr %s243, 8
        %s245 = scalar_lea.vmem %s1, %s244
        %s246 = smul.u32 4, %s20
      $region40: #{common_predictor_forward.4} parent=31 // pred_fallthru
        _
    $region32: #{common_predictor_forward.4} parent=5 // pred_fallthru
      _
    %p247 = scmp.le.s32.totalorder 1, %s12
    %p248 = scmp.lt.s32.totalorder %s12, 3
    %p249 = pnand %p247, %p248
    %p250 = pneg %p249
    // Predicated region
    $region41: #{common_predictor_forward.4} parent=5 // pred_check
      _
    $region42: #{common_predictor_forward.4} parent=5 // pred_check_branch
      %252 = sbr.rel (%p249) target = $region44
    $region43: #{common_predictor_forward.4} parent=5 // pred_region
      %s253 = ssub.s32 %s12, 1
      %s254 = smul.u32 4, %s22
      %p255 = scmp.lt.s32.totalorder %s254, 7
      %s256 = scalar_select %p255, %s254, 7
      %p257 = scmp.lt.s32.totalorder %s21, 0
      %s258 = scalar_select %p257, %s21, 0
      %s259 = sadd.s32 %s258, %s256
      %s260 = smul.addr %s259, 8
      %s261 = scalar_lea.vmem %s0, %s260
      %p262 = pneg %p52
      %p263 = pneg %p49
      %s264 = smul.u32 4, %s22
      %p265 = scmp.lt.s32.totalorder %s264, 7
      %s266 = scalar_select %p265, %s264, 7
      %p267 = scmp.lt.s32.totalorder %s21, 0
      %s268 = scalar_select %p267, %s21, 0
      %s269 = sadd.s32 %s268, %s266
      %s270 = smul.addr %s269, 8
      %s271 = scalar_lea.vmem %s1, %s270
      %p272 = pneg %p80
      %p273 = pneg %p77
      %p274 = pneg %p101
      %p275 = pneg %p98
      %p276 = pneg %p122
      %p277 = pneg %p119
      %p278 = pneg %p143
      %p279 = pneg %p140
      %p280 = pneg %p164
      %p281 = pneg %p161
      %p282 = pneg %p192
      %p283 = pneg %p189
      %s284 = smul.u32 4, %s22
      %p285 = scmp.lt.s32.totalorder %s284, 7
      %s286 = scalar_select %p285, %s284, 7
      %p287 = scmp.lt.s32.totalorder %s21, 0
      %s288 = scalar_select %p287, %s21, 0
      %s289 = sadd.s32 %s288, %s286
      %s290 = smul.addr %s289, 8
      %s291 = scalar_lea.vmem %s6, %s290
      %s292 = smul.u32 4, %s22
      %p293 = scmp.lt.s32.totalorder %s292, 7
      %s294 = scalar_select %p293, %s292, 7
      %p295 = scmp.lt.s32.totalorder %s21, 0
      %s296 = scalar_select %p295, %s21, 0
      %s297 = sadd.s32 %s296, %s294
      %s298 = smul.addr %s297, 8
      %s299 = scalar_lea.vmem %s0, %s298
      %s300 = smul.u32 4, %s22
      %s301 = smul.u32 4, %s22
      %p302 = scmp.lt.s32.totalorder %s301, 7
      %s303 = scalar_select %p302, %s301, 7
      %p304 = scmp.lt.s32.totalorder %s21, 0
      %s305 = scalar_select %p304, %s21, 0
      %s306 = sadd.s32 %s305, %s303
      %s307 = smul.addr %s306, 8
      %s308 = scalar_lea.vmem %s1, %s307
      %s309 = smul.u32 4, %s22
      %s310 = smul.u32 4, %s22
      %p311 = scmp.lt.s32.totalorder %s310, 7
      %s312 = scalar_select %p311, %s310, 7
      %p313 = scmp.lt.s32.totalorder %s21, 0
      %s314 = scalar_select %p313, %s21, 0
      %s315 = sadd.s32 %s314, %s312
      %s316 = smul.addr %s315, 8
      %s317 = scalar_lea.vmem %s6, %s316
      %s318 = smul.u32 4, %s22
      %p319 = scmp.eq.s32.totalorder %s22, 0
      // Predicated region
      $region45: #{common_predictor_forward.4} parent=43 // pred_check
        %p320 = pneg %p319
      $region46: #{common_predictor_forward.4} parent=43 // pred_check_branch
        %322 = sbr.rel (%p320) target = $region48
      $region47: #{common_predictor_forward.4} parent=43 // pred_region
        %vm323 = vcmask 261120
        %324 = vst.msk [vmem:[#allocation3] sm:$0xff] %vm323, 0.0
      $region48: #{common_predictor_forward.4} parent=43 // pred_fallthru
        _
      %v325 = vld [vmem:[%s299] sm:$0xff]
      %v326 = vld [vmem:[%s299 + $0x8] sm:$0xff]
      %v327 = vld [vmem:[%s299 + $0x10] sm:$0xff]
      %v328 = vld [vmem:[%s299 + $0x18] sm:$0xff]
      %v329 = vld [vmem:[%s2] sm:$0xff]
      %v330 = vld [vmem:[%s2 + $0x8] sm:$0xff]
      %v331 = vld [vmem:[%s2 + $0x10] sm:$0xff]
      %v332 = vld [vmem:[%s2 + $0x18] sm:$0xff]
      %v333 = vld [vmem:[%s3] sm:$0x1]
      %v335 = vlaneseq
      %v336 = vshrl.u32 %v335, 7
      %v337 = vsub.s32 0, %v336
      %v338 = vrot.slane %v333, %v337
      %vm340 = vcmask 261120
      %v342 = vsel %vm340, %v325, 0
      %v345 = vsel %vm340, %v326, 0
      %v348 = vsel %vm340, %v327, 0
      %v351 = vsel %vm340, %v328, 0
      %353 = vmatprep.subr.mxu0 0.0
      %354 = vmatpush1.msra.mxu0 %v329
      %355 = vmatprep.subr.mxu0 0.0
      %356 = vmatpush1.msra.mxu0 %v330
      %357 = vmatprep.subr.mxu0 0.0
      %358 = vmatpush1.msra.mxu0 %v331
      %359 = vmatprep.subr.mxu0 0.0
      %360 = vmatpush1.msra.mxu0 %v332
      %361 = vmatprep.subr.mxu0 0.0
      %362 = vmatpush1.msra.mxu0 0.0
      %363 = vmatprep.subr.mxu0 0.0
      %364 = vmatpush1.msra.mxu0 0.0
      %365 = vmatprep.subr.mxu0 0.0
      %366 = vmatpush1.msra.mxu0 0.0
      %367 = vmatprep.subr.mxu0 0.0
      %368 = vmatpush1.msra.mxu0 0.0
      %369 = vmatprep.subr.mxu0 0.0
      %370 = vmatpush1.msra.mxu0 0.0
      %371 = vmatprep.subr.mxu0 0.0
      %372 = vmatpush1.msra.mxu0 0.0
      %373 = vmatprep.subr.mxu0 0.0
      %374 = vmatpush1.msra.mxu0 0.0
      %375 = vmatprep.subr.mxu0 0.0
      %376 = vmatpush1.msra.mxu0 0.0
      %377 = vmatprep.subr.mxu0 0.0
      %378 = vmatpush1.msra.mxu0 0.0
      %379 = vmatprep.subr.mxu0 0.0
      %380 = vmatpush1.msra.mxu0 0.0
      %381 = vmatprep.subr.mxu0 0.0
      %382 = vmatpush1.msra.mxu0 0.0
      %383 = vmatprep.subr.mxu0 0.0
      %384 = vmatpush1.msra.mxu0 0.0
      %385 = vmatprep.subr.mxu0 0.0
      %386 = vmatpush1.msra.mxu0 0.0
      %387 = vmatprep.subr.mxu0 0.0
      %388 = vmatpush1.msra.mxu0 0.0
      %389 = vmatprep.subr.mxu0 0.0
      %390 = vmatpush1.msra.mxu0 0.0
      %391 = vmatprep.subr.mxu0 0.0
      %392 = vmatpush1.msra.mxu0 0.0
      %393 = vmatprep.subr.mxu0 0.0
      %394 = vmatpush1.msra.mxu0 0.0
      %395 = vmatprep.subr.mxu0 0.0
      %396 = vmatpush1.msra.mxu0 0.0
      %397 = vmatprep.subr.mxu0 0.0
      %398 = vmatpush1.msra.mxu0 0.0
      %399 = vmatprep.subr.mxu0 0.0
      %400 = vmatpush1.msra.mxu0 0.0
      %401 = vmatprep.subr.mxu0 0.0
      %402 = vmatpush1.msra.mxu0 0.0
      %403 = vmatprep.subr.mxu0 0.0
      %404 = vmatpush1.msra.mxu0 0.0
      %405 = vmatprep.subr.mxu0 0.0
      %406 = vmatpush1.msra.mxu0 0.0
      %407 = vmatprep.subr.mxu0 0.0
      %408 = vmatpush1.msra.mxu0 0.0
      %409 = vmatprep.subr.mxu0 0.0
      %410 = vmatpush1.msra.mxu0 0.0
      %411 = vmatprep.subr.mxu0 0.0
      %412 = vmatpush1.msra.mxu0 0.0
      %413 = vmatprep.subr.mxu0 0.0
      %414 = vmatpush1.msra.mxu0 0.0
      %415 = vmatprep.subr.mxu0 0.0
      %416 = vmatpush1.msra.mxu0 0.0
      %417 = vmatprep.mubr.f32.mxu0 0.0
      %418 = vmatmul.mubr.f32.gmra.mrb[0].mxu0 %v342
      %v419 = vpop.f32.mrb[0].mxu0
      %v420 = vadd.f32 %v338, %v419
      %v421 = vpop.f32.mrb[0].mxu0
      %422 = vmatprep.mubr.f32.mxu0 0.0
      %423 = vmatmul.mubr.f32.gmra.mrb[0].mxu0 %v345
      %v424 = vpop.f32.mrb[0].mxu0
      %v425 = vadd.f32 %v338, %v424
      %v426 = vpop.f32.mrb[0].mxu0
      %427 = vmatprep.mubr.f32.mxu0 0.0
      %428 = vmatmul.mubr.f32.gmra.mrb[0].mxu0 %v348
      %v429 = vpop.f32.mrb[0].mxu0
      %v430 = vadd.f32 %v338, %v429
      %v431 = vpop.f32.mrb[0].mxu0
      %432 = vmatprep.mubr.f32.mxu0 0.0
      %433 = vmatmul.mubr.f32.gmra.mrb[0].mxu0 %v351
      %v434 = vpop.f32.mrb[0].mxu0
      %v435 = vadd.f32 %v338, %v434
      %v436 = vpop.f32.mrb[0].mxu0
      %437 = vdwg.mxu0
      %vm438 = vcmask 785408
      %439 = vst.msk [vmem:[#allocation2] sm:$0xff] %vm438, %v420
      %440 = vst.msk [vmem:[#allocation2 + $0x8] sm:$0xff] %vm438, %v425
      %441 = vst.msk [vmem:[#allocation2 + $0x10] sm:$0xff] %vm438, %v430
      %442 = vst.msk [vmem:[#allocation2 + $0x18] sm:$0xff] %vm438, %v435
      %v443 = vld [vmem:[%s5] sm:$0x1]
      %v445 = vlaneseq
      %v446 = vshrl.u32 %v445, 7
      %v447 = vsub.s32 0, %v446
      %v448 = vrot.slane %v443, %v447
      %v449 = vld [vmem:[#allocation2] sm:$0xff]
      %v450 = vld [vmem:[#allocation3] sm:$0xff]
      %v451 = vld [vmem:[%s4] sm:$0xff]
      %v452 = vld [vmem:[%s4 + $0x8] sm:$0xff]
      %v453 = vld [vmem:[%s4 + $0x10] sm:$0xff]
      %v454 = vld [vmem:[%s4 + $0x18] sm:$0xff]
      %v456 = vsel %vm340, %v450, 0
      %458 = vmatprep.subr.mxu0 0.0
      %459 = vmatpush1.msra.mxu0 %v451
      %460 = vmatprep.subr.mxu0 0.0
      %461 = vmatpush1.msra.mxu0 %v452
      %462 = vmatprep.subr.mxu0 0.0
      %463 = vmatpush1.msra.mxu0 %v453
      %464 = vmatprep.subr.mxu0 0.0
      %465 = vmatpush1.msra.mxu0 %v454
      %466 = vmatprep.subr.mxu0 0.0
      %467 = vmatpush1.msra.mxu0 0.0
      %468 = vmatprep.subr.mxu0 0.0
      %469 = vmatpush1.msra.mxu0 0.0
      %470 = vmatprep.subr.mxu0 0.0
      %471 = vmatpush1.msra.mxu0 0.0
      %472 = vmatprep.subr.mxu0 0.0
      %473 = vmatpush1.msra.mxu0 0.0
      %474 = vmatprep.subr.mxu0 0.0
      %475 = vmatpush1.msra.mxu0 0.0
      %476 = vmatprep.subr.mxu0 0.0
      %477 = vmatpush1.msra.mxu0 0.0
      %478 = vmatprep.subr.mxu0 0.0
      %479 = vmatpush1.msra.mxu0 0.0
      %480 = vmatprep.subr.mxu0 0.0
      %481 = vmatpush1.msra.mxu0 0.0
      %482 = vmatprep.subr.mxu0 0.0
      %483 = vmatpush1.msra.mxu0 0.0
      %484 = vmatprep.subr.mxu0 0.0
      %485 = vmatpush1.msra.mxu0 0.0
      %486 = vmatprep.subr.mxu0 0.0
      %487 = vmatpush1.msra.mxu0 0.0
      %488 = vmatprep.subr.mxu0 0.0
      %489 = vmatpush1.msra.mxu0 0.0
      %490 = vmatprep.subr.mxu0 0.0
      %491 = vmatpush1.msra.mxu0 0.0
      %492 = vmatprep.subr.mxu0 0.0
      %493 = vmatpush1.msra.mxu0 0.0
      %494 = vmatprep.subr.mxu0 0.0
      %495 = vmatpush1.msra.mxu0 0.0
      %496 = vmatprep.subr.mxu0 0.0
      %497 = vmatpush1.msra.mxu0 0.0
      %498 = vmatprep.subr.mxu0 0.0
      %499 = vmatpush1.msra.mxu0 0.0
      %500 = vmatprep.subr.mxu0 0.0
      %501 = vmatpush1.msra.mxu0 0.0
      %502 = vmatprep.subr.mxu0 0.0
      %503 = vmatpush1.msra.mxu0 0.0
      %504 = vmatprep.subr.mxu0 0.0
      %505 = vmatpush1.msra.mxu0 0.0
      %506 = vmatprep.subr.mxu0 0.0
      %507 = vmatpush1.msra.mxu0 0.0
      %508 = vmatprep.subr.mxu0 0.0
      %509 = vmatpush1.msra.mxu0 0.0
      %510 = vmatprep.subr.mxu0 0.0
      %511 = vmatpush1.msra.mxu0 0.0
      %512 = vmatprep.subr.mxu0 0.0
      %513 = vmatpush1.msra.mxu0 0.0
      %514 = vmatprep.subr.mxu0 0.0
      %515 = vmatpush1.msra.mxu0 0.0
      %516 = vmatprep.subr.mxu0 0.0
      %517 = vmatpush1.msra.mxu0 0.0
      %518 = vmatprep.subr.mxu0 0.0
      %519 = vmatpush1.msra.mxu0 0.0
      %520 = vmatprep.subr.mxu0 0.0
      %521 = vmatpush1.msra.mxu0 0.0
      %522 = vmatprep.mubr.f32.mxu0 0.0
      %523 = vmatmul.mubr.f32.gmra.mrb[0].mxu0 %v456
      %v524 = vpop.f32.mrb[0].mxu0
      %v525 = vadd.f32 0.0, %v524
      %v526 = vpop.f32.mrb[0].mxu0
      %527 = vdwg.mxu0
      %v528 = vadd.f32 %v449, %v525
      %v529 = vxor.u32 %v528, 2147483648
      %v530 = vmul.f32 %v529, 1.442695
      %v531 = vpow.pop %v530
      %v532 = vadd.f32 %v531, 1.0
      %v533 = vrcp.pop %v532
      %v534 = vmul.f32 1.0, %v533
      %535 = vrot.lane.b32.xlu0 %v448, 64
      %v536 = vpop.permute.xlu0 %535
      %v538 = vadd.f32 %v525, %v536
      %540 = vrot.lane.b32.xlu0 %v538, 64
      %v541 = vpop.permute.xlu0 %540
      %v543 = vmul.f32 %v534, %v541
      %545 = vrot.lane.b32.xlu0 %v543, 64
      %v546 = vpop.permute.xlu0 %545
      %v548 = vadd.f32 %v449, %v546
      %v549 = vtanh.pop %v548
      %v550 = vsub.f32 1.0, %v534
      %552 = vrot.lane.b32.xlu0 %v549, 96
      %v553 = vpop.permute.xlu0 %552
      %v555 = vmul.f32 %v550, %v553
      %556 = vrot.lane.b32.xlu0 %v450, 32
      %v557 = vpop.permute.xlu0 %556
      %v559 = vmul.f32 %v534, %v557
      %v560 = vadd.f32 %v555, %v559
      %562 = vrot.lane.b32.xlu0 %v560, 96
      %v563 = vpop.permute.xlu0 %562
      %565 = vst.msk [vmem:[#allocation3] sm:$0xff] %vm340, %v563
      %v566 = vld [vmem:[%s308] sm:$0xff]
      %568 = vset.pattern.permute.xlu0 0
      %569 = vperm.xlu0 %568, %v566
      %v570 = vpop.permute.xlu0 %569
      %v572 = vmul.f32 %v560, %v570
      %574 = vrot.lane.b32.xlu0 %v572, 96
      %v575 = vpop.permute.xlu0 %574
      %577 = vst.msk [vmem:[%s317] sm:$0xff] %vm340, %v575
      %s578 = scalar_lea.vmem [#allocation2], 8
      %v579 = vld [vmem:[%s578] sm:$0xff]
      %v580 = vld [vmem:[#allocation3] sm:$0xff]
      %v581 = vld [vmem:[%s4] sm:$0xff]
      %v582 = vld [vmem:[%s4 + $0x8] sm:$0xff]
      %v583 = vld [vmem:[%s4 + $0x10] sm:$0xff]
      %v584 = vld [vmem:[%s4 + $0x18] sm:$0xff]
      %v586 = vsel %vm340, %v580, 0
      %588 = vmatprep.subr.mxu0 0.0
      %589 = vmatpush1.msra.mxu0 %v581
      %590 = vmatprep.subr.mxu0 0.0
      %591 = vmatpush1.msra.mxu0 %v582
      %592 = vmatprep.subr.mxu0 0.0
      %593 = vmatpush1.msra.mxu0 %v583
      %594 = vmatprep.subr.mxu0 0.0
      %595 = vmatpush1.msra.mxu0 %v584
      %596 = vmatprep.subr.mxu0 0.0
      %597 = vmatpush1.msra.mxu0 0.0
      %598 = vmatprep.subr.mxu0 0.0
      %599 = vmatpush1.msra.mxu0 0.0
      %600 = vmatprep.subr.mxu0 0.0
      %601 = vmatpush1.msra.mxu0 0.0
      %602 = vmatprep.subr.mxu0 0.0
      %603 = vmatpush1.msra.mxu0 0.0
      %604 = vmatprep.subr.mxu0 0.0
      %605 = vmatpush1.msra.mxu0 0.0
      %606 = vmatprep.subr.mxu0 0.0
      %607 = vmatpush1.msra.mxu0 0.0
      %608 = vmatprep.subr.mxu0 0.0
      %609 = vmatpush1.msra.mxu0 0.0
      %610 = vmatprep.subr.mxu0 0.0
      %611 = vmatpush1.msra.mxu0 0.0
      %612 = vmatprep.subr.mxu0 0.0
      %613 = vmatpush1.msra.mxu0 0.0
      %614 = vmatprep.subr.mxu0 0.0
      %615 = vmatpush1.msra.mxu0 0.0
      %616 = vmatprep.subr.mxu0 0.0
      %617 = vmatpush1.msra.mxu0 0.0
      %618 = vmatprep.subr.mxu0 0.0
      %619 = vmatpush1.msra.mxu0 0.0
      %620 = vmatprep.subr.mxu0 0.0
      %621 = vmatpush1.msra.mxu0 0.0
      %622 = vmatprep.subr.mxu0 0.0
      %623 = vmatpush1.msra.mxu0 0.0
      %624 = vmatprep.subr.mxu0 0.0
      %625 = vmatpush1.msra.mxu0 0.0
      %626 = vmatprep.subr.mxu0 0.0
      %627 = vmatpush1.msra.mxu0 0.0
      %628 = vmatprep.subr.mxu0 0.0
      %629 = vmatpush1.msra.mxu0 0.0
      %630 = vmatprep.subr.mxu0 0.0
      %631 = vmatpush1.msra.mxu0 0.0
      %632 = vmatprep.subr.mxu0 0.0
      %633 = vmatpush1.msra.mxu0 0.0
      %634 = vmatprep.subr.mxu0 0.0
      %635 = vmatpush1.msra.mxu0 0.0
      %636 = vmatprep.subr.mxu0 0.0
      %637 = vmatpush1.msra.mxu0 0.0
      %638 = vmatprep.subr.mxu0 0.0
      %639 = vmatpush1.msra.mxu0 0.0
      %640 = vmatprep.subr.mxu0 0.0
      %641 = vmatpush1.msra.mxu0 0.0
      %642 = vmatprep.subr.mxu0 0.0
      %643 = vmatpush1.msra.mxu0 0.0
      %644 = vmatprep.subr.mxu0 0.0
      %645 = vmatpush1.msra.mxu0 0.0
      %646 = vmatprep.subr.mxu0 0.0
      %647 = vmatpush1.msra.mxu0 0.0
      %648 = vmatprep.subr.mxu0 0.0
      %649 = vmatpush1.msra.mxu0 0.0
      %650 = vmatprep.subr.mxu0 0.0
      %651 = vmatpush1.msra.mxu0 0.0
      %652 = vmatprep.mubr.f32.mxu0 0.0
      %653 = vmatmul.mubr.f32.gmra.mrb[0].mxu0 %v586
      %v654 = vpop.f32.mrb[0].mxu0
      %v655 = vadd.f32 0.0, %v654
      %v656 = vpop.f32.mrb[0].mxu0
      %657 = vdwg.mxu0
      %v658 = vadd.f32 %v579, %v655
      %v659 = vxor.u32 %v658, 2147483648
      %v660 = vmul.f32 %v659, 1.442695
      %v661 = vpow.pop %v660
      %v662 = vadd.f32 %v661, 1.0
      %v663 = vrcp.pop %v662
      %v664 = vmul.f32 1.0, %v663
      %v665 = vadd.f32 %v655, %v536
      %667 = vrot.lane.b32.xlu0 %v665, 64
      %v668 = vpop.permute.xlu0 %667
      %v670 = vmul.f32 %v664, %v668
      %672 = vrot.lane.b32.xlu0 %v670, 64
      %v673 = vpop.permute.xlu0 %672
      %v675 = vadd.f32 %v579, %v673
      %v676 = vtanh.pop %v675
      %v677 = vsub.f32 1.0, %v664
      %679 = vrot.lane.b32.xlu0 %v676, 96
      %v680 = vpop.permute.xlu0 %679
      %v682 = vmul.f32 %v677, %v680
      %683 = vrot.lane.b32.xlu0 %v580, 32
      %v684 = vpop.permute.xlu0 %683
      %v686 = vmul.f32 %v664, %v684
      %v687 = vadd.f32 %v682, %v686
      %689 = vrot.lane.b32.xlu0 %v687, 96
      %v690 = vpop.permute.xlu0 %689
      %692 = vst.msk [vmem:[#allocation3] sm:$0xff] %vm340, %v690
      %s693 = scalar_lea.vmem %s308, 8
      %v694 = vld [vmem:[%s693] sm:$0xff]
      %696 = vset.pattern.permute.xlu0 0
      %697 = vperm.xlu0 %696, %v694
      %v698 = vpop.permute.xlu0 %697
      %v700 = vmul.f32 %v687, %v698
      %702 = vrot.lane.b32.xlu0 %v700, 96
      %v703 = vpop.permute.xlu0 %702
      %s705 = scalar_lea.vmem %s317, 8
      %706 = vst.msk [vmem:[%s705] sm:$0xff] %vm340, %v703
      %s707 = scalar_lea.vmem [#allocation2], 16
      %v708 = vld [vmem:[%s707] sm:$0xff]
      %v709 = vld [vmem:[#allocation3] sm:$0xff]
      %v710 = vld [vmem:[%s4] sm:$0xff]
      %v711 = vld [vmem:[%s4 + $0x8] sm:$0xff]
      %v712 = vld [vmem:[%s4 + $0x10] sm:$0xff]
      %v713 = vld [vmem:[%s4 + $0x18] sm:$0xff]
      %v715 = vsel %vm340, %v709, 0
      %717 = vmatprep.subr.mxu0 0.0
      %718 = vmatpush1.msra.mxu0 %v710
      %719 = vmatprep.subr.mxu0 0.0
      %720 = vmatpush1.msra.mxu0 %v711
      %721 = vmatprep.subr.mxu0 0.0
      %722 = vmatpush1.msra.mxu0 %v712
      %723 = vmatprep.subr.mxu0 0.0
      %724 = vmatpush1.msra.mxu0 %v713
      %725 = vmatprep.subr.mxu0 0.0
      %726 = vmatpush1.msra.mxu0 0.0
      %727 = vmatprep.subr.mxu0 0.0
      %728 = vmatpush1.msra.mxu0 0.0
      %729 = vmatprep.subr.mxu0 0.0
      %730 = vmatpush1.msra.mxu0 0.0
      %731 = vmatprep.subr.mxu0 0.0
      %732 = vmatpush1.msra.mxu0 0.0
      %733 = vmatprep.subr.mxu0 0.0
      %734 = vmatpush1.msra.mxu0 0.0
      %735 = vmatprep.subr.mxu0 0.0
      %736 = vmatpush1.msra.mxu0 0.0
      %737 = vmatprep.subr.mxu0 0.0
      %738 = vmatpush1.msra.mxu0 0.0
      %739 = vmatprep.subr.mxu0 0.0
      %740 = vmatpush1.msra.mxu0 0.0
      %741 = vmatprep.subr.mxu0 0.0
      %742 = vmatpush1.msra.mxu0 0.0
      %743 = vmatprep.subr.mxu0 0.0
      %744 = vmatpush1.msra.mxu0 0.0
      %745 = vmatprep.subr.mxu0 0.0
      %746 = vmatpush1.msra.mxu0 0.0
      %747 = vmatprep.subr.mxu0 0.0
      %748 = vmatpush1.msra.mxu0 0.0
      %749 = vmatprep.subr.mxu0 0.0
      %750 = vmatpush1.msra.mxu0 0.0
      %751 = vmatprep.subr.mxu0 0.0
      %752 = vmatpush1.msra.mxu0 0.0
      %753 = vmatprep.subr.mxu0 0.0
      %754 = vmatpush1.msra.mxu0 0.0
      %755 = vmatprep.subr.mxu0 0.0
      %756 = vmatpush1.msra.mxu0 0.0
      %757 = vmatprep.subr.mxu0 0.0
      %758 = vmatpush1.msra.mxu0 0.0
      %759 = vmatprep.subr.mxu0 0.0
      %760 = vmatpush1.msra.mxu0 0.0
      %761 = vmatprep.subr.mxu0 0.0
      %762 = vmatpush1.msra.mxu0 0.0
      %763 = vmatprep.subr.mxu0 0.0
      %764 = vmatpush1.msra.mxu0 0.0
      %765 = vmatprep.subr.mxu0 0.0
      %766 = vmatpush1.msra.mxu0 0.0
      %767 = vmatprep.subr.mxu0 0.0
      %768 = vmatpush1.msra.mxu0 0.0
      %769 = vmatprep.subr.mxu0 0.0
      %770 = vmatpush1.msra.mxu0 0.0
      %771 = vmatprep.subr.mxu0 0.0
      %772 = vmatpush1.msra.mxu0 0.0
      %773 = vmatprep.subr.mxu0 0.0
      %774 = vmatpush1.msra.mxu0 0.0
      %775 = vmatprep.subr.mxu0 0.0
      %776 = vmatpush1.msra.mxu0 0.0
      %777 = vmatprep.subr.mxu0 0.0
      %778 = vmatpush1.msra.mxu0 0.0
      %779 = vmatprep.subr.mxu0 0.0
      %780 = vmatpush1.msra.mxu0 0.0
      %781 = vmatprep.mubr.f32.mxu0 0.0
      %782 = vmatmul.mubr.f32.gmra.mrb[0].mxu0 %v715
      %v783 = vpop.f32.mrb[0].mxu0
      %v784 = vadd.f32 0.0, %v783
      %v785 = vpop.f32.mrb[0].mxu0
      %786 = vdwg.mxu0
      %v787 = vadd.f32 %v708, %v784
      %v788 = vxor.u32 %v787, 2147483648
      %v789 = vmul.f32 %v788, 1.442695
      %v790 = vpow.pop %v789
      %v791 = vadd.f32 %v790, 1.0
      %v792 = vrcp.pop %v791
      %v793 = vmul.f32 1.0, %v792
      %v794 = vadd.f32 %v784, %v536
      %796 = vrot.lane.b32.xlu0 %v794, 64
      %v797 = vpop.permute.xlu0 %796
      %v799 = vmul.f32 %v793, %v797
      %801 = vrot.lane.b32.xlu0 %v799, 64
      %v802 = vpop.permute.xlu0 %801
      %v804 = vadd.f32 %v708, %v802
      %v805 = vtanh.pop %v804
      %v806 = vsub.f32 1.0, %v793
      %808 = vrot.lane.b32.xlu0 %v805, 96
      %v809 = vpop.permute.xlu0 %808
      %v811 = vmul.f32 %v806, %v809
      %812 = vrot.lane.b32.xlu0 %v709, 32
      %v813 = vpop.permute.xlu0 %812
      %v815 = vmul.f32 %v793, %v813
      %v816 = vadd.f32 %v811, %v815
      %818 = vrot.lane.b32.xlu0 %v816, 96
      %v819 = vpop.permute.xlu0 %818
      %821 = vst.msk [vmem:[#allocation3] sm:$0xff] %vm340, %v819
      %s822 = scalar_lea.vmem %s308, 16
      %v823 = vld [vmem:[%s822] sm:$0xff]
      %825 = vset.pattern.permute.xlu0 0
      %826 = vperm.xlu0 %825, %v823
      %v827 = vpop.permute.xlu0 %826
      %v829 = vmul.f32 %v816, %v827
      %831 = vrot.lane.b32.xlu0 %v829, 96
      %v832 = vpop.permute.xlu0 %831
      %s834 = scalar_lea.vmem %s317, 16
      %835 = vst.msk [vmem:[%s834] sm:$0xff] %vm340, %v832
      %s836 = scalar_lea.vmem [#allocation2], 24
      %v837 = vld [vmem:[%s836] sm:$0xff]
      %v838 = vld [vmem:[#allocation3] sm:$0xff]
      %v839 = vld [vmem:[%s4] sm:$0xff]
      %v840 = vld [vmem:[%s4 + $0x8] sm:$0xff]
      %v841 = vld [vmem:[%s4 + $0x10] sm:$0xff]
      %v842 = vld [vmem:[%s4 + $0x18] sm:$0xff]
      %v844 = vsel %vm340, %v838, 0
      %846 = vmatprep.subr.mxu0 0.0
      %847 = vmatpush1.msra.mxu0 %v839
      %848 = vmatprep.subr.mxu0 0.0
      %849 = vmatpush1.msra.mxu0 %v840
      %850 = vmatprep.subr.mxu0 0.0
      %851 = vmatpush1.msra.mxu0 %v841
      %852 = vmatprep.subr.mxu0 0.0
      %853 = vmatpush1.msra.mxu0 %v842
      %854 = vmatprep.subr.mxu0 0.0
      %855 = vmatpush1.msra.mxu0 0.0
      %856 = vmatprep.subr.mxu0 0.0
      %857 = vmatpush1.msra.mxu0 0.0
      %858 = vmatprep.subr.mxu0 0.0
      %859 = vmatpush1.msra.mxu0 0.0
      %860 = vmatprep.subr.mxu0 0.0
      %861 = vmatpush1.msra.mxu0 0.0
      %862 = vmatprep.subr.mxu0 0.0
      %863 = vmatpush1.msra.mxu0 0.0
      %864 = vmatprep.subr.mxu0 0.0
      %865 = vmatpush1.msra.mxu0 0.0
      %866 = vmatprep.subr.mxu0 0.0
      %867 = vmatpush1.msra.mxu0 0.0
      %868 = vmatprep.subr.mxu0 0.0
      %869 = vmatpush1.msra.mxu0 0.0
      %870 = vmatprep.subr.mxu0 0.0
      %871 = vmatpush1.msra.mxu0 0.0
      %872 = vmatprep.subr.mxu0 0.0
      %873 = vmatpush1.msra.mxu0 0.0
      %874 = vmatprep.subr.mxu0 0.0
      %875 = vmatpush1.msra.mxu0 0.0
      %876 = vmatprep.subr.mxu0 0.0
      %877 = vmatpush1.msra.mxu0 0.0
      %878 = vmatprep.subr.mxu0 0.0
      %879 = vmatpush1.msra.mxu0 0.0
      %880 = vmatprep.subr.mxu0 0.0
      %881 = vmatpush1.msra.mxu0 0.0
      %882 = vmatprep.subr.mxu0 0.0
      %883 = vmatpush1.msra.mxu0 0.0
      %884 = vmatprep.subr.mxu0 0.0
      %885 = vmatpush1.msra.mxu0 0.0
      %886 = vmatprep.subr.mxu0 0.0
      %887 = vmatpush1.msra.mxu0 0.0
      %888 = vmatprep.subr.mxu0 0.0
      %889 = vmatpush1.msra.mxu0 0.0
      %890 = vmatprep.subr.mxu0 0.0
      %891 = vmatpush1.msra.mxu0 0.0
      %892 = vmatprep.subr.mxu0 0.0
      %893 = vmatpush1.msra.mxu0 0.0
      %894 = vmatprep.subr.mxu0 0.0
      %895 = vmatpush1.msra.mxu0 0.0
      %896 = vmatprep.subr.mxu0 0.0
      %897 = vmatpush1.msra.mxu0 0.0
      %898 = vmatprep.subr.mxu0 0.0
      %899 = vmatpush1.msra.mxu0 0.0
      %900 = vmatprep.subr.mxu0 0.0
      %901 = vmatpush1.msra.mxu0 0.0
      %902 = vmatprep.subr.mxu0 0.0
      %903 = vmatpush1.msra.mxu0 0.0
      %904 = vmatprep.subr.mxu0 0.0
      %905 = vmatpush1.msra.mxu0 0.0
      %906 = vmatprep.subr.mxu0 0.0
      %907 = vmatpush1.msra.mxu0 0.0
      %908 = vmatprep.subr.mxu0 0.0
      %909 = vmatpush1.msra.mxu0 0.0
      %910 = vmatprep.mubr.f32.mxu0 0.0
      %911 = vmatmul.mubr.f32.gmra.mrb[0].mxu0 %v844
      %v912 = vpop.f32.mrb[0].mxu0
      %v913 = vadd.f32 0.0, %v912
      %v914 = vpop.f32.mrb[0].mxu0
      %915 = vdwg.mxu0
      %v916 = vadd.f32 %v837, %v913
      %v917 = vxor.u32 %v916, 2147483648
      %v918 = vmul.f32 %v917, 1.442695
      %v919 = vpow.pop %v918
      %v920 = vadd.f32 %v919, 1.0
      %v921 = vrcp.pop %v920
      %v922 = vmul.f32 1.0, %v921
      %v923 = vadd.f32 %v913, %v536
      %925 = vrot.lane.b32.xlu0 %v923, 64
      %v926 = vpop.permute.xlu0 %925
      %v928 = vmul.f32 %v922, %v926
      %930 = vrot.lane.b32.xlu0 %v928, 64
      %v931 = vpop.permute.xlu0 %930
      %v933 = vadd.f32 %v837, %v931
      %v934 = vtanh.pop %v933
      %v935 = vsub.f32 1.0, %v922
      %937 = vrot.lane.b32.xlu0 %v934, 96
      %v938 = vpop.permute.xlu0 %937
      %v940 = vmul.f32 %v935, %v938
      %941 = vrot.lane.b32.xlu0 %v838, 32
      %v942 = vpop.permute.xlu0 %941
      %v944 = vmul.f32 %v922, %v942
      %v945 = vadd.f32 %v940, %v944
      %947 = vrot.lane.b32.xlu0 %v945, 96
      %v948 = vpop.permute.xlu0 %947
      %950 = vst.msk [vmem:[#allocation3] sm:$0xff] %vm340, %v948
      %s951 = scalar_lea.vmem %s308, 24
      %v952 = vld [vmem:[%s951] sm:$0xff]
      %954 = vset.pattern.permute.xlu0 0
      %955 = vperm.xlu0 %954, %v952
      %v956 = vpop.permute.xlu0 %955
      %v958 = vmul.f32 %v945, %v956
      %960 = vrot.lane.b32.xlu0 %v958, 96
      %v961 = vpop.permute.xlu0 %960
      %s963 = scalar_lea.vmem %s317, 24
      %964 = vst.msk [vmem:[%s963] sm:$0xff] %vm340, %v961
      %s965 = smul.u32 4, %s22
      %p966 = scmp.lt.s32.totalorder %s965, 7
      %s967 = scalar_select %p966, %s965, 7
      %p968 = scmp.lt.s32.totalorder %s21, 0
      %s969 = scalar_select %p968, %s21, 0
      %s970 = sadd.s32 %s969, %s967
      %s971 = smul.addr %s970, 8
      %s972 = scalar_lea.vmem %s6, %s971
      // Predicated region
      $region49: #{common_predictor_forward.4} parent=43 // pred_check
        %p973 = pneg %p189
      $region50: #{common_predictor_forward.4} parent=43 // pred_check_branch
        %975 = sbr.rel (%p973) target = $region52
      $region51: #{common_predictor_forward.4} parent=43 // pred_region
        %s976 = smul.u32 4, %s22
      $region52: #{common_predictor_forward.4} parent=43 // pred_fallthru
        _
    $region44: #{common_predictor_forward.4} parent=5 // pred_fallthru
      _
    %p977 = scmp.le.s32.totalorder 2, %s12
    // Predicated region
    $region53: #{common_predictor_forward.4} parent=5 // pred_check
      %p978 = pneg %p977
    $region54: #{common_predictor_forward.4} parent=5 // pred_check_branch
      %980 = sbr.rel (%p978) target = $region56
    $region55: #{common_predictor_forward.4} parent=5 // pred_region
      %s981 = ssub.s32 %s12, 2
      // Predicated region
      $region57: #{common_predictor_forward.4} parent=55 // pred_check
        %p982 = pneg %p195
      $region58: #{common_predictor_forward.4} parent=55 // pred_check_branch
        %984 = sbr.rel (%p982) target = $region60
      $region59: #{common_predictor_forward.4} parent=55 // pred_region
        %s985 = smul.u32 4, %s24
        %p986 = scmp.lt.s32.totalorder %s985, 7
        %s987 = scalar_select %p986, %s985, 7
        %p988 = scmp.lt.s32.totalorder %s23, 0
        %s989 = scalar_select %p988, %s23, 0
        %s990 = sadd.s32 %s989, %s987
        %s991 = smul.addr %s990, 8
        %s992 = scalar_lea.vmem %s6, %s991
      $region60: #{common_predictor_forward.4} parent=55 // pred_fallthru
        _
    $region56: #{common_predictor_forward.4} parent=5 // pred_fallthru
      _
  $region6: #{common_predictor_forward.4} parent=0 // loop_footer
    %s16 = sadd.s32 1, %s12
  $region7: #{common_predictor_forward.4} parent=0 // loop_footer_branch
    %11 = sbr.rel target = $region3
  $region8: #{common_predictor_forward.4} parent=0 // loop_exit
    _

// kernel: common_predictor_forward.7
$region0: #{common_predictor_forward.7}
  #allocation0 [shape = 'u32[]', space=smem, size = 0x4, offset = 0x4, fixed_abs, tag = 'smem constant byte address 0x4 - core index']
  #allocation1 [shape = 'u32[144,128]{1,0:T(1,128)}', space=vmem, size = 0x12000, scoped, tag = 'internal scratch']
  #allocation2 [shape = 'f32[1,1]{1,0:T(1,128)S(1)}', space=vmem, size = 0x200, scoped, tag = 'scoped memory for common_predictor_forward.7']
  %s0 = inlined_call_operand.vmem [shape: f32[64,32], index: 0, kind: input, shape index: {}]
  %s1 = inlined_call_operand.vmem [shape: f32[64,1], index: 1, kind: input, shape index: {}]
  %s2 = inlined_call_operand.vmem [shape: f32[32,32], index: 2, kind: input, shape index: {}]
  %s3 = inlined_call_operand.vmem [shape: f32[1,32], index: 3, kind: input, shape index: {}]
  %s4 = inlined_call_operand.vmem [shape: f32[1,32], index: 4, kind: input, shape index: {}]
  %s5 = inlined_call_operand.vmem [shape: f32[1,32], index: 5, kind: input, shape index: {}]
  %s6 = inlined_call_operand.vmem [shape: f32[1,32], index: 6, kind: input, shape index: {}]
  %s7 = inlined_call_operand.<no memory space> [shape: f32[1,1], index: 7, kind: input, shape index: {}]
  %s8 = inlined_call_operand.vmem [shape: f32[64,1], index: 8, kind: output, shape index: {}]
  %s9 = sld [smem:[#allocation0]]
  $region65: #{common_predictor_forward.7} parent=0
    _
  %s11 = ssub.s32 1, %s9
  %s12 = scalar_select 0, %s11, %s9
  %v13 = vstv %s7
  %14 = vst [vmem:[#allocation2] sm:$0x1] %v13
  loop: start=0, step=1, limit=4
  $region2: #{common_predictor_forward.7} parent=0 // loop_pre_header
    _
  $region3: #{common_predictor_forward.7} parent=0 // loop_header
    %s16 = sphi 0, %s20
    %p17 = scmp.ge.s32.totalorder %s16, 4
    %s26 = sphi 0, %s28
    %s29 = sphi 0, %s26
    %s30 = sphi 0, %s29
    %s46 = sphi 0, %s30
    %s52 = sphi 0, %s54
    %s55 = sphi 0, %s52
    %s56 = sphi 0, %s55
    %s72 = sphi 0, %s56
    %s76 = sphi 0, %s76
    %s78 = sphi 0, %s76
    %s79 = sphi 0, %s78
    %s93 = sphi 0, %s79
    %s97 = sphi 0, %s97
    %s99 = sphi 0, %s97
    %s100 = sphi 0, %s99
    %s114 = sphi 0, %s100
    %s118 = sphi 0, %s118
    %s120 = sphi 0, %s118
    %s121 = sphi 0, %s120
    %s135 = sphi 0, %s121
    %s139 = sphi 0, %s139
    %s141 = sphi 0, %s139
    %s142 = sphi 0, %s141
    %s156 = sphi 0, %s142
    %s160 = sphi 0, %s160
    %s162 = sphi 0, %s160
    %s163 = sphi 0, %s162
    %s177 = sphi 0, %s163
    %s181 = sphi 0, %s181
    %s183 = sphi 0, %s181
    %s184 = sphi 0, %s183
    %s198 = sphi 0, %s184
    %s204 = sphi 0, %s206
    %s207 = sphi 0, %s204
    %s208 = sphi 0, %s207
    %s224 = sphi 0, %s208
  $region4: #{common_predictor_forward.7} parent=0 // loop_header_branch
    %19 = sbr.rel (%p17) target = $region8
  $region5: #{common_predictor_forward.7} parent=0 // loop_body
    %s21 = ssub.s32 %s16, 1
    %s22 = ssub.s32 %s16, 2
    %s23 = sadd.s32 %s16, 1
    %s24 = ssub.s32 %s16, %s23
    %p25 = scmp.eq.s32.totalorder %s24, 0
    %s27 = sadd.s32 %s26, 1
    %s28 = scalar_select %p25, %s26, %s27
    %p31 = pneg %p25
    %p32 = scmp.eq.s32.totalorder %s16, 1
    %p33 = por %p31, %p32
    %p34 = scmp.ne.s32.totalorder %s26, %s29
    %p35 = scmp.eq.s32.totalorder %s16, 0
    %p36 = por %p34, %p35
    %p37 = scmp.ne.s32.totalorder %s26, %s29
    %p38 = scmp.eq.s32.totalorder %s21, 1
    %p39 = por %p37, %p38
    %p40 = scmp.ne.s32.totalorder %s29, %s30
    %p41 = scmp.eq.s32.totalorder %s21, 0
    %p42 = por %p40, %p41
    %p43 = scmp.ne.s32.totalorder %s29, %s30
    %p44 = scmp.eq.s32.totalorder %s22, 1
    %p45 = por %p43, %p44
    %p47 = scmp.ne.s32.totalorder %s30, %s46
    %p48 = scmp.eq.s32.totalorder %s22, 0
    %p49 = por %p47, %p48
    %s50 = ssub.s32 %s16, %s23
    %p51 = scmp.eq.s32.totalorder %s50, 0
    %s53 = sadd.s32 %s52, 1
    %s54 = scalar_select %p51, %s52, %s53
    %p57 = pneg %p51
    %p58 = scmp.eq.s32.totalorder %s16, 1
    %p59 = por %p57, %p58
    %p60 = scmp.ne.s32.totalorder %s52, %s55
    %p61 = scmp.eq.s32.totalorder %s16, 0
    %p62 = por %p60, %p61
    %p63 = scmp.ne.s32.totalorder %s52, %s55
    %p64 = scmp.eq.s32.totalorder %s21, 1
    %p65 = por %p63, %p64
    %p66 = scmp.ne.s32.totalorder %s55, %s56
    %p67 = scmp.eq.s32.totalorder %s21, 0
    %p68 = por %p66, %p67
    %p69 = scmp.ne.s32.totalorder %s55, %s56
    %p70 = scmp.eq.s32.totalorder %s22, 1
    %p71 = por %p69, %p70
    %p73 = scmp.ne.s32.totalorder %s56, %s72
    %p74 = scmp.eq.s32.totalorder %s22, 0
    %p75 = por %p73, %p74
    %s77 = sadd.s32 %s76, 1
    %p80 = scmp.eq.s32.totalorder %s16, 1
    %p81 = scmp.ne.s32.totalorder %s76, %s78
    %p82 = scmp.eq.s32.totalorder %s16, 0
    %p83 = por %p81, %p82
    %p84 = scmp.ne.s32.totalorder %s76, %s78
    %p85 = scmp.eq.s32.totalorder %s21, 1
    %p86 = por %p84, %p85
    %p87 = scmp.ne.s32.totalorder %s78, %s79
    %p88 = scmp.eq.s32.totalorder %s21, 0
    %p89 = por %p87, %p88
    %p90 = scmp.ne.s32.totalorder %s78, %s79
    %p91 = scmp.eq.s32.totalorder %s22, 1
    %p92 = por %p90, %p91
    %p94 = scmp.ne.s32.totalorder %s79, %s93
    %p95 = scmp.eq.s32.totalorder %s22, 0
    %p96 = por %p94, %p95
    %s98 = sadd.s32 %s97, 1
    %p101 = scmp.eq.s32.totalorder %s16, 1
    %p102 = scmp.ne.s32.totalorder %s97, %s99
    %p103 = scmp.eq.s32.totalorder %s16, 0
    %p104 = por %p102, %p103
    %p105 = scmp.ne.s32.totalorder %s97, %s99
    %p106 = scmp.eq.s32.totalorder %s21, 1
    %p107 = por %p105, %p106
    %p108 = scmp.ne.s32.totalorder %s99, %s100
    %p109 = scmp.eq.s32.totalorder %s21, 0
    %p110 = por %p108, %p109
    %p111 = scmp.ne.s32.totalorder %s99, %s100
    %p112 = scmp.eq.s32.totalorder %s22, 1
    %p113 = por %p111, %p112
    %p115 = scmp.ne.s32.totalorder %s100, %s114
    %p116 = scmp.eq.s32.totalorder %s22, 0
    %p117 = por %p115, %p116
    %s119 = sadd.s32 %s118, 1
    %p122 = scmp.eq.s32.totalorder %s16, 1
    %p123 = scmp.ne.s32.totalorder %s118, %s120
    %p124 = scmp.eq.s32.totalorder %s16, 0
    %p125 = por %p123, %p124
    %p126 = scmp.ne.s32.totalorder %s118, %s120
    %p127 = scmp.eq.s32.totalorder %s21, 1
    %p128 = por %p126, %p127
    %p129 = scmp.ne.s32.totalorder %s120, %s121
    %p130 = scmp.eq.s32.totalorder %s21, 0
    %p131 = por %p129, %p130
    %p132 = scmp.ne.s32.totalorder %s120, %s121
    %p133 = scmp.eq.s32.totalorder %s22, 1
    %p134 = por %p132, %p133
    %p136 = scmp.ne.s32.totalorder %s121, %s135
    %p137 = scmp.eq.s32.totalorder %s22, 0
    %p138 = por %p136, %p137
    %s140 = sadd.s32 %s139, 1
    %p143 = scmp.eq.s32.totalorder %s16, 1
    %p144 = scmp.ne.s32.totalorder %s139, %s141
    %p145 = scmp.eq.s32.totalorder %s16, 0
    %p146 = por %p144, %p145
    %p147 = scmp.ne.s32.totalorder %s139, %s141
    %p148 = scmp.eq.s32.totalorder %s21, 1
    %p149 = por %p147, %p148
    %p150 = scmp.ne.s32.totalorder %s141, %s142
    %p151 = scmp.eq.s32.totalorder %s21, 0
    %p152 = por %p150, %p151
    %p153 = scmp.ne.s32.totalorder %s141, %s142
    %p154 = scmp.eq.s32.totalorder %s22, 1
    %p155 = por %p153, %p154
    %p157 = scmp.ne.s32.totalorder %s142, %s156
    %p158 = scmp.eq.s32.totalorder %s22, 0
    %p159 = por %p157, %p158
    %s161 = sadd.s32 %s160, 1
    %p164 = scmp.eq.s32.totalorder %s16, 1
    %p165 = scmp.ne.s32.totalorder %s160, %s162
    %p166 = scmp.eq.s32.totalorder %s16, 0
    %p167 = por %p165, %p166
    %p168 = scmp.ne.s32.totalorder %s160, %s162
    %p169 = scmp.eq.s32.totalorder %s21, 1
    %p170 = por %p168, %p169
    %p171 = scmp.ne.s32.totalorder %s162, %s163
    %p172 = scmp.eq.s32.totalorder %s21, 0
    %p173 = por %p171, %p172
    %p174 = scmp.ne.s32.totalorder %s162, %s163
    %p175 = scmp.eq.s32.totalorder %s22, 1
    %p176 = por %p174, %p175
    %p178 = scmp.ne.s32.totalorder %s163, %s177
    %p179 = scmp.eq.s32.totalorder %s22, 0
    %p180 = por %p178, %p179
    %s182 = sadd.s32 %s181, 1
    %p185 = scmp.eq.s32.totalorder %s16, 1
    %p186 = scmp.ne.s32.totalorder %s181, %s183
    %p187 = scmp.eq.s32.totalorder %s16, 0
    %p188 = por %p186, %p187
    %p189 = scmp.ne.s32.totalorder %s181, %s183
    %p190 = scmp.eq.s32.totalorder %s21, 1
    %p191 = por %p189, %p190
    %p192 = scmp.ne.s32.totalorder %s183, %s184
    %p193 = scmp.eq.s32.totalorder %s21, 0
    %p194 = por %p192, %p193
    %p195 = scmp.ne.s32.totalorder %s183, %s184
    %p196 = scmp.eq.s32.totalorder %s22, 1
    %p197 = por %p195, %p196
    %p199 = scmp.ne.s32.totalorder %s184, %s198
    %p200 = scmp.eq.s32.totalorder %s22, 0
    %p201 = por %p199, %p200
    %s202 = ssub.s32 %s16, %s23
    %p203 = scmp.eq.s32.totalorder %s202, 0
    %s205 = sadd.s32 %s204, 1
    %s206 = scalar_select %p203, %s204, %s205
    %p209 = pneg %p203
    %p210 = scmp.eq.s32.totalorder %s16, 1
    %p211 = por %p209, %p210
    %p212 = scmp.ne.s32.totalorder %s204, %s207
    %p213 = scmp.eq.s32.totalorder %s16, 0
    %p214 = por %p212, %p213
    %p215 = scmp.ne.s32.totalorder %s204, %s207
    %p216 = scmp.eq.s32.totalorder %s21, 1
    %p217 = por %p215, %p216
    %p218 = scmp.ne.s32.totalorder %s207, %s208
    %p219 = scmp.eq.s32.totalorder %s21, 0
    %p220 = por %p218, %p219
    %p221 = scmp.ne.s32.totalorder %s207, %s208
    %p222 = scmp.eq.s32.totalorder %s22, 1
    %p223 = por %p221, %p222
    %p225 = scmp.ne.s32.totalorder %s208, %s224
    %p226 = scmp.eq.s32.totalorder %s22, 0
    %p227 = por %p225, %p226
    %p228 = scmp.le.s32.totalorder 1, %s16
    %p229 = scmp.lt.s32.totalorder %s16, 3
    %p230 = pnand %p228, %p229
    %p231 = pneg %p230
    // Predicated region
    $region9: #{common_predictor_forward.7} parent=5 // pred_check
      _
    $region10: #{common_predictor_forward.7} parent=5 // pred_check_branch
      %233 = sbr.rel (%p230) target = $region12
    $region11: #{common_predictor_forward.7} parent=5 // pred_region
      %s234 = ssub.s32 %s16, 1
      // Predicated region
      $region13: #{common_predictor_forward.7} parent=11 // pred_check
        %p235 = pneg %p89
      $region14: #{common_predictor_forward.7} parent=11 // pred_check_branch
        %237 = sbr.rel (%p235) target = $region16
      $region15: #{common_predictor_forward.7} parent=11 // pred_region
        _
      $region16: #{common_predictor_forward.7} parent=11 // pred_fallthru
        _
      // Predicated region
      $region17: #{common_predictor_forward.7} parent=11 // pred_check
        %p238 = pneg %p110
      $region18: #{common_predictor_forward.7} parent=11 // pred_check_branch
        %240 = sbr.rel (%p238) target = $region20
      $region19: #{common_predictor_forward.7} parent=11 // pred_region
        _
      $region20: #{common_predictor_forward.7} parent=11 // pred_fallthru
        _
      // Predicated region
      $region21: #{common_predictor_forward.7} parent=11 // pred_check
        %p241 = pneg %p131
      $region22: #{common_predictor_forward.7} parent=11 // pred_check_branch
        %243 = sbr.rel (%p241) target = $region24
      $region23: #{common_predictor_forward.7} parent=11 // pred_region
        _
      $region24: #{common_predictor_forward.7} parent=11 // pred_fallthru
        _
      // Predicated region
      $region25: #{common_predictor_forward.7} parent=11 // pred_check
        %p244 = pneg %p152
      $region26: #{common_predictor_forward.7} parent=11 // pred_check_branch
        %246 = sbr.rel (%p244) target = $region28
      $region27: #{common_predictor_forward.7} parent=11 // pred_region
        _
      $region28: #{common_predictor_forward.7} parent=11 // pred_fallthru
        _
      // Predicated region
      $region29: #{common_predictor_forward.7} parent=11 // pred_check
        %p247 = pneg %p173
      $region30: #{common_predictor_forward.7} parent=11 // pred_check_branch
        %249 = sbr.rel (%p247) target = $region32
      $region31: #{common_predictor_forward.7} parent=11 // pred_region
        _
      $region32: #{common_predictor_forward.7} parent=11 // pred_fallthru
        _
      // Predicated region
      $region33: #{common_predictor_forward.7} parent=11 // pred_check
        %p250 = pneg %p194
      $region34: #{common_predictor_forward.7} parent=11 // pred_check_branch
        %252 = sbr.rel (%p250) target = $region36
      $region35: #{common_predictor_forward.7} parent=11 // pred_region
        _
      $region36: #{common_predictor_forward.7} parent=11 // pred_fallthru
        _
    $region12: #{common_predictor_forward.7} parent=5 // pred_fallthru
      _
    %p253 = scmp.lt.s32.totalorder %s16, 2
    // Predicated region
    $region37: #{common_predictor_forward.7} parent=5 // pred_check
      %p254 = pneg %p253
    $region38: #{common_predictor_forward.7} parent=5 // pred_check_branch
      %256 = sbr.rel (%p254) target = $region40
    $region39: #{common_predictor_forward.7} parent=5 // pred_region
      // Predicated region
      $region41: #{common_predictor_forward.7} parent=39 // pred_check
        %p257 = pneg %p36
      $region42: #{common_predictor_forward.7} parent=39 // pred_check_branch
        %259 = sbr.rel (%p257) target = $region44
      $region43: #{common_predictor_forward.7} parent=39 // pred_region
        %s260 = smul.u32 4, %s16
        %p261 = scmp.lt.s32.totalorder %s260, 7
        %s262 = scalar_select %p261, %s260, 7
        %s263 = smul.addr %s262, 8
        %s264 = scalar_lea.vmem %s0, %s263
        %s265 = smul.u32 4, %s16
      $region44: #{common_predictor_forward.7} parent=39 // pred_fallthru
        _
      // Predicated region
      $region45: #{common_predictor_forward.7} parent=39 // pred_check
        %p266 = pneg %p62
      $region46: #{common_predictor_forward.7} parent=39 // pred_check_branch
        %268 = sbr.rel (%p266) target = $region48
      $region47: #{common_predictor_forward.7} parent=39 // pred_region
        %s269 = smul.u32 4, %s16
        %p270 = scmp.lt.s32.totalorder %s269, 7
        %s271 = scalar_select %p270, %s269, 7
        %s272 = smul.addr %s271, 8
        %s273 = scalar_lea.vmem %s1, %s272
        %s274 = smul.u32 4, %s16
      $region48: #{common_predictor_forward.7} parent=39 // pred_fallthru
        _
    $region40: #{common_predictor_forward.7} parent=5 // pred_fallthru
      _
    %p275 = scmp.le.s32.totalorder 1, %s16
    %p276 = scmp.lt.s32.totalorder %s16, 3
    %p277 = pnand %p275, %p276
    %p278 = pneg %p277
    // Predicated region
    $region49: #{common_predictor_forward.7} parent=5 // pred_check
      _
    $region50: #{common_predictor_forward.7} parent=5 // pred_check_branch
      %280 = sbr.rel (%p277) target = $region52
    $region51: #{common_predictor_forward.7} parent=5 // pred_region
      %s281 = ssub.s32 %s16, 1
      %s282 = smul.u32 4, %s21
      %p283 = scmp.lt.s32.totalorder %s282, 7
      %s284 = scalar_select %p283, %s282, 7
      %s285 = smul.addr %s284, 8
      %s286 = scalar_lea.vmem %s0, %s285
      %p287 = pneg %p42
      %p288 = pneg %p39
      %s289 = smul.u32 4, %s21
      %p290 = scmp.lt.s32.totalorder %s289, 7
      %s291 = scalar_select %p290, %s289, 7
      %s292 = smul.addr %s291, 8
      %s293 = scalar_lea.vmem %s1, %s292
      %p294 = pneg %p68
      %p295 = pneg %p65
      %p296 = pneg %p89
      %p297 = pneg %p86
      %p298 = pneg %p110
      %p299 = pneg %p107
      %p300 = pneg %p131
      %p301 = pneg %p128
      %p302 = pneg %p152
      %p303 = pneg %p149
      %p304 = pneg %p173
      %p305 = pneg %p170
      %p306 = pneg %p194
      %p307 = pneg %p191
      %p308 = pneg %p220
      %p309 = pneg %p217
      %s310 = smul.u32 4, %s21
      %p311 = scmp.lt.s32.totalorder %s310, 7
      %s312 = scalar_select %p311, %s310, 7
      %s313 = smul.addr %s312, 8
      %s314 = scalar_lea.vmem %s8, %s313
      %s315 = smul.u32 4, %s21
      %p316 = scmp.lt.s32.totalorder %s315, 7
      %s317 = scalar_select %p316, %s315, 7
      %s318 = smul.addr %s317, 8
      %s319 = scalar_lea.vmem %s0, %s318
      %s320 = smul.u32 4, %s21
      %s321 = smul.u32 4, %s21
      %p322 = scmp.lt.s32.totalorder %s321, 7
      %s323 = scalar_select %p322, %s321, 7
      %s324 = smul.addr %s323, 8
      %s325 = scalar_lea.vmem %s1, %s324
      %s326 = smul.u32 4, %s21
      %s327 = smul.u32 4, %s21
      %p328 = scmp.lt.s32.totalorder %s327, 7
      %s329 = scalar_select %p328, %s327, 7
      %s330 = smul.addr %s329, 8
      %s331 = scalar_lea.vmem %s8, %s330
      %s332 = smul.u32 4, %s21
      %v333 = vld [vmem:[%s319] sm:$0xff]
      %v334 = vld [vmem:[%s319 + $0x8] sm:$0xff]
      %v335 = vld [vmem:[%s319 + $0x10] sm:$0xff]
      %v336 = vld [vmem:[%s319 + $0x18] sm:$0xff]
      %v337 = vld [vmem:[%s2] sm:$0xff]
      %v338 = vld [vmem:[%s2 + $0x8] sm:$0xff]
      %v339 = vld [vmem:[%s2 + $0x10] sm:$0xff]
      %v340 = vld [vmem:[%s2 + $0x18] sm:$0xff]
      %v341 = vld [vmem:[%s3] sm:$0x1]
      %v343 = vlaneseq
      %v344 = vshrl.u32 %v343, 7
      %v345 = vsub.s32 0, %v344
      %v346 = vrot.slane %v341, %v345
      %vm348 = vcmask 261120
      %v350 = vsel %vm348, %v333, 0
      %v353 = vsel %vm348, %v334, 0
      %v356 = vsel %vm348, %v335, 0
      %v359 = vsel %vm348, %v336, 0
      %361 = vmatprep.subr.mxu0 0.0
      %362 = vmatpush1.msra.mxu0 %v337
      %363 = vmatprep.subr.mxu0 0.0
      %364 = vmatpush1.msra.mxu0 %v338
      %365 = vmatprep.subr.mxu0 0.0
      %366 = vmatpush1.msra.mxu0 %v339
      %367 = vmatprep.subr.mxu0 0.0
      %368 = vmatpush1.msra.mxu0 %v340
      %369 = vmatprep.subr.mxu0 0.0
      %370 = vmatpush1.msra.mxu0 0.0
      %371 = vmatprep.subr.mxu0 0.0
      %372 = vmatpush1.msra.mxu0 0.0
      %373 = vmatprep.subr.mxu0 0.0
      %374 = vmatpush1.msra.mxu0 0.0
      %375 = vmatprep.subr.mxu0 0.0
      %376 = vmatpush1.msra.mxu0 0.0
      %377 = vmatprep.subr.mxu0 0.0
      %378 = vmatpush1.msra.mxu0 0.0
      %379 = vmatprep.subr.mxu0 0.0
      %380 = vmatpush1.msra.mxu0 0.0
      %381 = vmatprep.subr.mxu0 0.0
      %382 = vmatpush1.msra.mxu0 0.0
      %383 = vmatprep.subr.mxu0 0.0
      %384 = vmatpush1.msra.mxu0 0.0
      %385 = vmatprep.subr.mxu0 0.0
      %386 = vmatpush1.msra.mxu0 0.0
      %387 = vmatprep.subr.mxu0 0.0
      %388 = vmatpush1.msra.mxu0 0.0
      %389 = vmatprep.subr.mxu0 0.0
      %390 = vmatpush1.msra.mxu0 0.0
      %391 = vmatprep.subr.mxu0 0.0
      %392 = vmatpush1.msra.mxu0 0.0
      %393 = vmatprep.subr.mxu0 0.0
      %394 = vmatpush1.msra.mxu0 0.0
      %395 = vmatprep.subr.mxu0 0.0
      %396 = vmatpush1.msra.mxu0 0.0
      %397 = vmatprep.subr.mxu0 0.0
      %398 = vmatpush1.msra.mxu0 0.0
      %399 = vmatprep.subr.mxu0 0.0
      %400 = vmatpush1.msra.mxu0 0.0
      %401 = vmatprep.subr.mxu0 0.0
      %402 = vmatpush1.msra.mxu0 0.0
      %403 = vmatprep.subr.mxu0 0.0
      %404 = vmatpush1.msra.mxu0 0.0
      %405 = vmatprep.subr.mxu0 0.0
      %406 = vmatpush1.msra.mxu0 0.0
      %407 = vmatprep.subr.mxu0 0.0
      %408 = vmatpush1.msra.mxu0 0.0
      %409 = vmatprep.subr.mxu0 0.0
      %410 = vmatpush1.msra.mxu0 0.0
      %411 = vmatprep.subr.mxu0 0.0
      %412 = vmatpush1.msra.mxu0 0.0
      %413 = vmatprep.subr.mxu0 0.0
      %414 = vmatpush1.msra.mxu0 0.0
      %415 = vmatprep.subr.mxu0 0.0
      %416 = vmatpush1.msra.mxu0 0.0
      %417 = vmatprep.subr.mxu0 0.0
      %418 = vmatpush1.msra.mxu0 0.0
      %419 = vmatprep.subr.mxu0 0.0
      %420 = vmatpush1.msra.mxu0 0.0
      %421 = vmatprep.subr.mxu0 0.0
      %422 = vmatpush1.msra.mxu0 0.0
      %423 = vmatprep.subr.mxu0 0.0
      %424 = vmatpush1.msra.mxu0 0.0
      %425 = vmatprep.mubr.f32.mxu0 0.0
      %426 = vmatmul.mubr.f32.gmra.mrb[0].mxu0 %v350
      %v427 = vpop.f32.mrb[0].mxu0
      %v428 = vadd.f32 %v346, %v427
      %v429 = vpop.f32.mrb[0].mxu0
      %430 = vmatprep.mubr.f32.mxu0 0.0
      %431 = vmatmul.mubr.f32.gmra.mrb[0].mxu0 %v353
      %v432 = vpop.f32.mrb[0].mxu0
      %v433 = vadd.f32 %v346, %v432
      %v434 = vpop.f32.mrb[0].mxu0
      %435 = vmatprep.mubr.f32.mxu0 0.0
      %436 = vmatmul.mubr.f32.gmra.mrb[0].mxu0 %v356
      %v437 = vpop.f32.mrb[0].mxu0
      %v438 = vadd.f32 %v346, %v437
      %v439 = vpop.f32.mrb[0].mxu0
      %440 = vmatprep.mubr.f32.mxu0 0.0
      %441 = vmatmul.mubr.f32.gmra.mrb[0].mxu0 %v359
      %v442 = vpop.f32.mrb[0].mxu0
      %v443 = vadd.f32 %v346, %v442
      %v444 = vpop.f32.mrb[0].mxu0
      %445 = vdwg.mxu0
      %v446 = vsel %vm348, %v428, 0.0
      %447 = vadd.xlane.f32.xlu0 %v446
      %v448 = vpop.xlane.xlu0 %447
      %v449 = vsel %vm348, %v433, 0.0
      %450 = vadd.xlane.f32.xlu0 %v449
      %v451 = vpop.xlane.xlu0 %450
      %v452 = vsel %vm348, %v438, 0.0
      %453 = vadd.xlane.f32.xlu0 %v452
      %v454 = vpop.xlane.xlu0 %453
      %v455 = vsel %vm348, %v443, 0.0
      %456 = vadd.xlane.f32.xlu0 %v455
      %v457 = vpop.xlane.xlu0 %456
      %v458 = vrcp.pop 32.0
      %v459 = vmul.f32 %v448, %v458
      %v460 = vmul.f32 %v451, %v458
      %v461 = vmul.f32 %v454, %v458
      %v462 = vmul.f32 %v457, %v458
      %v463 = vsub.f32 %v428, %v459
      %v464 = vsub.f32 %v433, %v460
      %v465 = vsub.f32 %v438, %v461
      %v466 = vsub.f32 %v443, %v462
      %v467 = vmul.f32 %v463, %v463
      %v468 = vmul.f32 %v464, %v464
      %v469 = vmul.f32 %v465, %v465
      %v470 = vmul.f32 %v466, %v466
      %v471 = vsel %vm348, %v467, 0.0
      %472 = vadd.xlane.f32.xlu0 %v471
      %v473 = vpop.xlane.xlu0 %472
      %v474 = vsel %vm348, %v468, 0.0
      %475 = vadd.xlane.f32.xlu0 %v474
      %v476 = vpop.xlane.xlu0 %475
      %v477 = vsel %vm348, %v469, 0.0
      %478 = vadd.xlane.f32.xlu0 %v477
      %v479 = vpop.xlane.xlu0 %478
      %v480 = vsel %vm348, %v470, 0.0
      %481 = vadd.xlane.f32.xlu0 %v480
      %v482 = vpop.xlane.xlu0 %481
      %v483 = vmul.f32 %v473, %v458
      %v484 = vmul.f32 %v476, %v458
      %v485 = vmul.f32 %v479, %v458
      %v486 = vmul.f32 %v482, %v458
      %v487 = vadd.f32 %v483, 1e-06
      %v488 = vadd.f32 %v484, 1e-06
      %v489 = vadd.f32 %v485, 1e-06
      %v490 = vadd.f32 %v486, 1e-06
      %v491 = vrsqrt.pop %v487
      %v492 = vrsqrt.pop %v488
      %v493 = vrsqrt.pop %v489
      %v494 = vrsqrt.pop %v490
      %v495 = vmul.f32 %v463, %v491
      %v496 = vmul.f32 %v464, %v492
      %v497 = vmul.f32 %v465, %v493
      %v498 = vmul.f32 %v466, %v494
      %v499 = vld [vmem:[%s4] sm:$0x1]
      %v501 = vlaneseq
      %v502 = vshrl.u32 %v501, 7
      %v503 = vsub.s32 0, %v502
      %v504 = vrot.slane %v499, %v503
      %v506 = vmul.f32 %v495, %v504
      %v507 = vmul.f32 %v496, %v504
      %v508 = vmul.f32 %v497, %v504
      %v509 = vmul.f32 %v498, %v504
      %v510 = vld [vmem:[%s5] sm:$0x1]
      %v512 = vlaneseq
      %v513 = vshrl.u32 %v512, 7
      %v514 = vsub.s32 0, %v513
      %v515 = vrot.slane %v510, %v514
      %v517 = vadd.f32 %v506, %v515
      %v518 = vadd.f32 %v507, %v515
      %v519 = vadd.f32 %v508, %v515
      %v520 = vadd.f32 %v509, %v515
      %v521 = vmax.f32 %v517, 0.0
      %v522 = vmax.f32 %v518, 0.0
      %v523 = vmax.f32 %v519, 0.0
      %v524 = vmax.f32 %v520, 0.0
      %v525 = vld [vmem:[%s6] sm:$0x1]
      %v527 = vlaneseq
      %v528 = vshrl.u32 %v527, 7
      %v529 = vsub.s32 0, %v528
      %v530 = vrot.slane %v525, %v529
      %v532 = vmul.f32 %v521, %v530
      %v533 = vmul.f32 %v522, %v530
      %v534 = vmul.f32 %v523, %v530
      %v535 = vmul.f32 %v524, %v530
      %v536 = vsel %vm348, %v532, 0.0
      %537 = vadd.xlane.f32.xlu0 %v536
      %v538 = vpop.xlane.xlu0 %537
      %v539 = vsel %vm348, %v533, 0.0
      %540 = vadd.xlane.f32.xlu0 %v539
      %v541 = vpop.xlane.xlu0 %540
      %v542 = vsel %vm348, %v534, 0.0
      %543 = vadd.xlane.f32.xlu0 %v542
      %v544 = vpop.xlane.xlu0 %543
      %v545 = vsel %vm348, %v535, 0.0
      %546 = vadd.xlane.f32.xlu0 %v545
      %v547 = vpop.xlane.xlu0 %546
      %v548 = vld [vmem:[#allocation2] sm:$0x1]
      %v550 = vlaneseq
      %v551 = vshrl.u32 %v550, 7
      %v552 = vsub.s32 0, %v551
      %v553 = vrot.slane %v548, %v552
      %v555 = vadd.f32 %v538, %v553
      %v556 = vadd.f32 %v541, %v553
      %v557 = vadd.f32 %v544, %v553
      %v558 = vadd.f32 %v547, %v553
      %v559 = vld [vmem:[%s325] sm:$0xff]
      %v560 = vld [vmem:[%s325 + $0x8] sm:$0xff]
      %v561 = vld [vmem:[%s325 + $0x10] sm:$0xff]
      %v562 = vld [vmem:[%s325 + $0x18] sm:$0xff]
      %v563 = vsub.f32 1.0, %v559
      %v564 = vsub.f32 1.0, %v560
      %v565 = vsub.f32 1.0, %v561
      %v566 = vsub.f32 1.0, %v562
      %v567 = vmul.f32 %v563, -1e+30
      %v568 = vmul.f32 %v564, -1e+30
      %v569 = vmul.f32 %v565, -1e+30
      %v570 = vmul.f32 %v566, -1e+30
      %v571 = vadd.f32 %v555, %v567
      %v572 = vadd.f32 %v556, %v568
      %v573 = vadd.f32 %v557, %v569
      %v574 = vadd.f32 %v558, %v570
      %vm575 = vcmask 7168
      %576 = vst.msk [vmem:[%s331] sm:$0xff] %vm575, %v571
      %577 = vst.msk [vmem:[%s331 + $0x8] sm:$0xff] %vm575, %v572
      %578 = vst.msk [vmem:[%s331 + $0x10] sm:$0xff] %vm575, %v573
      %579 = vst.msk [vmem:[%s331 + $0x18] sm:$0xff] %vm575, %v574
      %s580 = smul.u32 4, %s21
      %p581 = scmp.lt.s32.totalorder %s580, 7
      %s582 = scalar_select %p581, %s580, 7
      %s583 = smul.addr %s582, 8
      %s584 = scalar_lea.vmem %s8, %s583
      // Predicated region
      $region53: #{common_predictor_forward.7} parent=51 // pred_check
        %p585 = pneg %p217
      $region54: #{common_predictor_forward.7} parent=51 // pred_check_branch
        %587 = sbr.rel (%p585) target = $region56
      $region55: #{common_predictor_forward.7} parent=51 // pred_region
        %s588 = smul.u32 4, %s21
      $region56: #{common_predictor_forward.7} parent=51 // pred_fallthru
        _
    $region52: #{common_predictor_forward.7} parent=5 // pred_fallthru
      _
    %p589 = scmp.le.s32.totalorder 2, %s16
    // Predicated region
    $region57: #{common_predictor_forward.7} parent=5 // pred_check
      %p590 = pneg %p589
    $region58: #{common_predictor_forward.7} parent=5 // pred_check_branch
      %592 = sbr.rel (%p590) target = $region60
    $region59: #{common_predictor_forward.7} parent=5 // pred_region
      %s593 = ssub.s32 %s16, 2
      // Predicated region
      $region61: #{common_predictor_forward.7} parent=59 // pred_check
        %p594 = pneg %p223
      $region62: #{common_predictor_forward.7} parent=59 // pred_check_branch
        %596 = sbr.rel (%p594) target = $region64
      $region63: #{common_predictor_forward.7} parent=59 // pred_region
        %s597 = smul.u32 4, %s22
        %p598 = scmp.lt.s32.totalorder %s597, 7
        %s599 = scalar_select %p598, %s597, 7
        %s600 = smul.addr %s599, 8
        %s601 = scalar_lea.vmem %s8, %s600
      $region64: #{common_predictor_forward.7} parent=59 // pred_fallthru
        _
    $region60: #{common_predictor_forward.7} parent=5 // pred_fallthru
      _
  $region6: #{common_predictor_forward.7} parent=0 // loop_footer
    %s20 = sadd.s32 1, %s16
  $region7: #{common_predictor_forward.7} parent=0 // loop_footer_branch
    %15 = sbr.rel target = $region3
  $region8: #{common_predictor_forward.7} parent=0 // loop_exit
    _

</llo_original>
